<compile_context>
chip_gen: v6e
topology: v6e:2x2x1
jax: 0.10.0
libtpu: 0.0.40
codegen_flags: <defaults>
</compile_context>

<pallas_src>
import jax
import jax.numpy as jnp
from jax import lax
from jax.experimental import pallas as pl
from jax.experimental.pallas import tpu as pltpu

EPS = 1e-5                    # nn.BatchNorm2d default eps
MXU_DTYPE = jnp.bfloat16      # matmul operand dtype (f32 accumulation on the MXU)
ACT_DTYPE = jnp.bfloat16      # HBM activation storage dtype


def _vmem_limit_bytes():
    """Generation-aware VMEM cap: ~3/4 of physical, never above 100 MiB."""
    cap = 64 * 1024 * 1024    # conservative default = v7x per-core VMEM
    try:
        info = pltpu.get_tpu_info()
        for name in ("vmem_capacity_bytes", "vmem_size_bytes", "vmem_bytes"):
            v = getattr(info, name, None)
            if v:
                cap = int(v)
                break
    except Exception:
        pass
    return min((cap * 3) // 4, 100 * 1024 * 1024)


VMEM_LIMIT = _vmem_limit_bytes()


# ----------------------------- kernel bodies ---------------------------------
def conv1_stats_kernel(x_ref, w_ref, y_ref, s_ref, q_ref):
    """Stage 1: conv1 (3x3, pad=1) + per-step BN1 partial stats.

    x_ref: (B, H+2, (W+2)*Cin)        bf16 spatially pre-padded input block
    w_ref: (3*(W+2)*Cin, (W+2)*Cmid)  bf16 dy-stacked block-banded weights
    y_ref: (B, H, (W+2)*Cmid)         bf16 raw conv1 output (zero W-border blocks)
    s_ref / q_ref: (1, 1, (W+2)*Cmid) f32 partial sum / sum-of-squares
    """
    b, h, kout = y_ref.shape
    x = x_ref[...]                                        # bf16, no extra casts
    # dy taps concatenated along K, images stacked along M -> one deep matmul.
    slab = jnp.concatenate(
        [jnp.concatenate([x[i, 0:h], x[i, 1:h + 1], x[i, 2:h + 2]], axis=-1)
         for i in range(b)], axis=0)                      # (B*H, 3*Kin)
    acc = jnp.dot(slab, w_ref[...], preferred_element_type=jnp.float32)
    y_ref[...] = acc.reshape(b, h, kout).astype(y_ref.dtype)
    s_ref[0] = jnp.sum(acc, axis=0, keepdims=True)
    q_ref[0] = jnp.sum(acc * acc, axis=0, keepdims=True)


def bn_relu_conv2_stats_kernel(y_ref, sc_ref, sh_ref, w_ref, o_ref, s_ref, q_ref):
    """Stage 2: BN1-affine + ReLU fused with conv2 + BN2 partial stats.

    y_ref : (B, H, (W+2)*Cmid)        bf16 raw conv1 output
    sc/sh : (1, (W+2)*Cmid)           f32 BN1 scale/shift (ZERO on W-border blocks)
    w_ref : (3*(W+2)*Cmid, (W+2)*Cout) bf16 dy-stacked block-banded weights
    o_ref : (B, H, W*Cout)            bf16 conv2 output, interior columns only
    s/q   : (1, 1, W*Cout)            f32 partial stats (interior only)
    """
    b, h, kout_int = o_ref.shape
    kmid = y_ref.shape[2]
    kout_full = w_ref.shape[1]
    off = (kout_full - kout_int) // 2      # = Cout (one zero border column block)

    # BN1(train) affine + ReLU in f32.  W-border columns stay exactly zero because
    # sc/sh are zero there (zero-halo invariant, see _banded_weights / _tile_w).
    y2d = y_ref[...].reshape(b * h, kmid).astype(jnp.float32)
    z = jnp.maximum(y2d * sc_ref[...] + sh_ref[...], 0.0)
    zb = z.astype(w_ref.dtype)             # single bf16 cast for the MXU operand
    zero_row = jnp.zeros((1, kmid), zb.dtype)

    # Vertical pad=1 halo built via row shifts (no VMEM scratch round trip);
    # dy taps along K, images along M.
    slabs = []
    for i in range(b):
        zi = zb[i * h:(i + 1) * h]
        top = jnp.concatenate([zero_row, zi[:h - 1]], axis=0)   # dy = 0
        bot = jnp.concatenate([zi[1:], zero_row], axis=0)       # dy = 2
        slabs.append(jnp.concatenate([top, zi, bot], axis=-1))
    slab = jnp.concatenate(slabs, axis=0)                        # (B*H, 3*Kmid)

    acc = jnp.dot(slab, w_ref[...], preferred_element_type=jnp.float32)
    acc_int = acc[:, off:off + kout_int]   # drop zero W-border output blocks
    o_ref[...] = acc_int.reshape(b, h, kout_int).astype(o_ref.dtype)
    s_ref[0] = jnp.sum(acc_int, axis=0, keepdims=True)
    q_ref[0] = jnp.sum(acc_int * acc_int, axis=0, keepdims=True)


def bn_relu_kernel(y_ref, sc_ref, sh_ref, o_ref):
    """Stage 3: BN2-affine + ReLU on lane-dense (W*Cout) multi-image tiles."""
    b, h, kc = o_ref.shape
    y = y_ref[...].reshape(b * h, kc).astype(jnp.float32)
    z = jnp.maximum(y * sc_ref[...] + sh_ref[...], 0.0)
    o_ref[...] = z.reshape(b, h, kc)


# ------------------------------ pallas_call wrappers --------------------------
def _conv1_stage(x_pad, w_band, bb):
    n, hp2, kin = x_pad.shape
    h = hp2 - 2
    kout = w_band.shape[1]
    g = n // bb
    f32 = jnp.float32
    return pl.pallas_call(
        conv1_stats_kernel,
        grid=(g,),
        in_specs=[
            pl.BlockSpec((bb, hp2, kin), lambda i: (i, 0, 0)),
            pl.BlockSpec(w_band.shape, lambda i: (0, 0)),
        ],
        out_specs=(
            pl.BlockSpec((bb, h, kout), lambda i: (i, 0, 0)),
            pl.BlockSpec((1, 1, kout), lambda i: (i, 0, 0)),
            pl.BlockSpec((1, 1, kout), lambda i: (i, 0, 0)),
        ),
        out_shape=(
            jax.ShapeDtypeStruct((n, h, kout), ACT_DTYPE),
            jax.ShapeDtypeStruct((g, 1, kout), f32),
            jax.ShapeDtypeStruct((g, 1, kout), f32),
        ),
        compiler_params=pltpu.CompilerParams(
            dimension_semantics=("parallel",),
            vmem_limit_bytes=VMEM_LIMIT,
        ),
    )(x_pad, w_band)


def _bn_relu_conv2_stage(y1, sc1, sh1, w_band, bb, w_spatial, cout):
    n, h, kmid = y1.shape
    kout_int = w_spatial * cout
    g = n // bb
    f32 = jnp.float32
    return pl.pallas_call(
        bn_relu_conv2_stats_kernel,
        grid=(g,),
        in_specs=[
            pl.BlockSpec((bb, h, kmid), lambda i: (i, 0, 0)),
            pl.BlockSpec((1, kmid), lambda i: (0, 0)),
            pl.BlockSpec((1, kmid), lambda i: (0, 0)),
            pl.BlockSpec(w_band.shape, lambda i: (0, 0)),
        ],
        out_specs=(
            pl.BlockSpec((bb, h, kout_int), lambda i: (i, 0, 0)),
            pl.BlockSpec((1, 1, kout_int), lambda i: (i, 0, 0)),
            pl.BlockSpec((1, 1, kout_int), lambda i: (i, 0, 0)),
        ),
        out_shape=(
            jax.ShapeDtypeStruct((n, h, kout_int), ACT_DTYPE),
            jax.ShapeDtypeStruct((g, 1, kout_int), f32),
            jax.ShapeDtypeStruct((g, 1, kout_int), f32),
        ),
        compiler_params=pltpu.CompilerParams(
            dimension_semantics=("parallel",),
            vmem_limit_bytes=VMEM_LIMIT,
        ),
    )(y1, sc1, sh1, w_band)


def _bn_relu_stage(y2, sc2, sh2, bb):
    n, h, kc = y2.shape
    g = n // bb
    return pl.pallas_call(
        bn_relu_kernel,
        grid=(g,),
        in_specs=[
            pl.BlockSpec((bb, h, kc), lambda i: (i, 0, 0)),
            pl.BlockSpec((1, kc), lambda i: (0, 0)),
            pl.BlockSpec((1, kc), lambda i: (0, 0)),
        ],
        out_specs=pl.BlockSpec((bb, h, kc), lambda i: (i, 0, 0)),
        out_shape=jax.ShapeDtypeStruct((n, h, kc), jnp.float32),
        compiler_params=pltpu.CompilerParams(
            dimension_semantics=("parallel",),
            vmem_limit_bytes=VMEM_LIMIT,
        ),
    )(y2, sc2, sh2)


# ------------------------------ host-side glue --------------------------------
def _banded_weights(w_oihw, w_spatial):
    """PyTorch (Cout, Cin, 3, 3) -> (3*(W+2)*Cin, (W+2)*Cout) block-banded matrix
    with the three dy taps stacked along K (matches the in-kernel slab concat).

    Wband[dy*(W+2)*Cin + (j+dx)*Cin + ci, (j+1)*Cout + co] = w[co, ci, dy, dx].
    INVARIANT: the two W-border OUTPUT column blocks (j'=0 and j'=W+1) are zero, so
    each conv output carries its own zero W-halo; any affine (BN) applied to such an
    activation must also be zero on those blocks (see _tile_w(with_border=True)).
    """
    cout, cin = w_oihw.shape[0], w_oihw.shape[1]
    wp = w_spatial + 2
    taps = jnp.transpose(w_oihw, (2, 3, 1, 0)).astype(jnp.float32)  # (dy,dx,Cin,Cout)
    big = jnp.zeros((3, wp * cin, wp * cout), jnp.float32)
    j = jnp.arange(w_spatial)
    for dx in range(3):
        sel = jnp.zeros((wp, wp), jnp.float32).at[j + dx, j + 1].set(1.0)
        for dy in range(3):
            big = big.at[dy].add(jnp.kron(sel, taps[dy, dx]))
    return big.reshape(3 * wp * cin, wp * cout).astype(MXU_DTYPE)


def _bn_scale_shift(s_part, q_part, gamma, beta, count, c):
    """Fold per-grid-step channel partials into train-mode BN scale/shift."""
    s = jnp.sum(s_part, axis=(0, 1)).reshape(-1, c).sum(axis=0)
    q = jnp.sum(q_part, axis=(0, 1)).reshape(-1, c).sum(axis=0)
    mean = s / count
    var = jnp.maximum(q / count - mean * mean, 0.0)       # biased batch variance
    scale = gamma.astype(jnp.float32) * lax.rsqrt(var + EPS)
    shift = beta.astype(jnp.float32) - mean * scale
    return scale, shift


def _tile_w(scale, shift, w_spatial, c, with_border):
    """Tile per-channel scale/shift over width.  When the target activation layout
    still carries the W-border column blocks, they MUST be zero (halo invariant)."""
    sc = jnp.tile(scale, w_spatial)
    sh = jnp.tile(shift, w_spatial)
    if with_border:
        z = jnp.zeros((c,), jnp.float32)
        sc = jnp.concatenate([z, sc, z])
        sh = jnp.concatenate([z, sh, z])
    return sc.reshape(1, -1), sh.reshape(1, -1)


def _pick_image_block(n, h, target_rows=256):
    """Images per grid step so the matmul M = bb*H is ~256 (must divide n)."""
    bb = max(1, min(n, max(1, target_rows // max(h, 1))))
    while n % bb:
        bb -= 1
    return bb


def _pick_elementwise_block(n, h, kc, target_bytes=1 << 20):
    """Images per grid step for the elementwise sweep (target ~1 MiB tiles)."""
    per_image = h * kc * 6          # bf16 read + f32 write
    bb = max(1, min(n, max(1, target_bytes // max(per_image, 1))))
    while n % bb:
        bb -= 1
    return bb


@jax.jit
def double_conv(x_nchw, w1, g1, b1, w2, g2, b2):
    """DoubleConv forward.  x: (N, Cin, H, W); w*: PyTorch (Cout, Cin, 3, 3)."""
    n, cin, h, w = x_nchw.shape
    cmid, cout = w1.shape[0], w2.shape[0]
    wp = w + 2

    # NCHW -> NHWC, pad=1 spatially, flatten (W+2, C) into the lane dim, then one
    # bf16 cast (activations live in HBM as bf16; BN math stays f32).
    x = jnp.transpose(x_nchw, (0, 2, 3, 1)).astype(jnp.float32)
    x = jnp.pad(x, ((0, 0), (1, 1), (1, 1), (0, 0)))
    x = x.reshape(n, h + 2, wp * cin).astype(ACT_DTYPE)

    w1_band = _banded_weights(w1, w)      # (3*wp*cin,  wp*cmid)
    w2_band = _banded_weights(w2, w)      # (3*wp*cmid, wp*cout)

    bb = _pick_image_block(n, h)

    # stage 1: conv1 + BN1 partial stats
    y1, s1, q1 = _conv1_stage(x, w1_band, bb)
    scale1, shift1 = _bn_scale_shift(s1, q1, g1, b1, n * h * w, cmid)
    sc1, sh1 = _tile_w(scale1, shift1, w, cmid, with_border=True)

    # stage 2: BN1 + ReLU fused with conv2 + BN2 partial stats (interior output)
    y2, s2, q2 = _bn_relu_conv2_stage(y1, sc1, sh1, w2_band, bb, w, cout)
    scale2, shift2 = _bn_scale_shift(s2, q2, g2, b2, n * h * w, cout)
    sc2, sh2 = _tile_w(scale2, shift2, w, cout, with_border=False)

    # stage 3: BN2 + ReLU, lane-dense W*Cout tiles (border drop already fused)
    bb3 = _pick_elementwise_block(n, h, w * cout)
    out = _bn_relu_stage(y2, sc2, sh2, bb3)

    out = out.reshape(n, h, w, cout)
    return jnp.transpose(out, (0, 3, 1, 2))        # NHWC -> NCHW like PyTorch


# ----------------------------- pure-JAX reference -----------------------------
def _conv_ref(x_nhwc, w_oihw):
    w_hwio = jnp.transpose(w_oihw, (2, 3, 1, 0)).astype(MXU_DTYPE)
    return lax.conv_general_dilated(
        x_nhwc.astype(MXU_DTYPE), w_hwio, (1, 1), ((1, 1), (1, 1)),
        dimension_numbers=("NHWC", "HWIO", "NHWC"),
        preferred_element_type=jnp.float32)


def _bn_relu_ref(y, gamma, beta):
    mean = jnp.mean(y, axis=(0, 1, 2))
    var = jnp.mean(y * y, axis=(0, 1, 2)) - mean * mean
    scale = gamma * lax.rsqrt(var + EPS)
    shift = beta - mean * scale
    return jnp.maximum(y * scale + shift, 0.0)


def double_conv_ref(x_nchw, w1, g1, b1, w2, g2, b2):
    x = jnp.transpose(x_nchw, (0, 2, 3, 1)).astype(jnp.float32)
    y1 = _conv_ref(x, w1)
    z1 = _bn_relu_ref(y1, g1, b1)
    y2 = _conv_ref(z1, w2)
    out = _bn_relu_ref(y2, g2, b2)
    return jnp.transpose(out, (0, 3, 1, 2))


if __name__ == "__main__":
    N, Cin, Cmid, H, W = 2, 4, 8, 16, 16      # DoubleConv(in=4, out=8)

    key = jax.random.PRNGKey(0)
    kx, kw1, kw2 = jax.random.split(key, 3)
    x = jax.random.normal(kx, (N, Cin, H, W), jnp.float32)

    # Conv2d weights (PyTorch OIHW layout), deterministic synthetic init.
    w1 = jax.random.normal(kw1, (Cmid, Cin, 3, 3), jnp.float32) * 0.1
    w2 = jax.random.normal(kw2, (Cmid, Cmid, 3, 3), jnp.float32) * 0.1
    # BatchNorm2d default init: weight (gamma) = 1, bias (beta) = 0.
    g1 = jnp.ones((Cmid,), jnp.float32)
    b1 = jnp.zeros((Cmid,), jnp.float32)
    g2 = jnp.ones((Cmid,), jnp.float32)
    b2 = jnp.zeros((Cmid,), jnp.float32)

    out = jax.block_until_ready(double_conv(x, w1, g1, b1, w2, g2, b2))
    ref = jax.block_until_ready(double_conv_ref(x, w1, g1, b1, w2, g2, b2))

    assert out.shape == (N, Cmid, H, W)
    # Tolerance reflects bf16 storage of the two inter-stage activations (the
    # f32 reference keeps activations in f32 between its bf16-operand convs).
    assert jnp.allclose(out, ref, atol=3e-2, rtol=2e-2), (
        f"mismatch vs reference, max abs err = {jnp.max(jnp.abs(out - ref))}")
    print("KERNEL_OK")
</pallas_src>

<mosaic_0001>
module attributes {stable_mosaic.version = 11 : i64} {
  func.func @conv1_stats_kernel(%arg0: i32, %arg1: memref<2x18x72xbf16, #tpu.memory_space<vmem>>, %arg2: memref<216x144xbf16, #tpu.memory_space<vmem>>, %arg3: memref<2x16x144xbf16, #tpu.memory_space<vmem>>, %arg4: memref<1x1x144xf32, #tpu.memory_space<vmem>>, %arg5: memref<1x1x144xf32, #tpu.memory_space<vmem>>) attributes {dimension_semantics = [#tpu.dimension_semantics<parallel>], iteration_bounds = array<i64: 1>, scalar_prefetch = 0 : i64, scratch_operands = 0 : i64, tpu.core_type = #tpu.core_type<tc>, window_params = [{transform_indices = @transform_0, window_bounds = array<i64: 2, 18, 72>}, {pipeline_mode = #tpu.pipeline_mode<synchronous>, transform_indices = @transform_1, window_bounds = array<i64: 216, 144>}, {transform_indices = @transform_2, window_bounds = array<i64: 2, 16, 144>}, {transform_indices = @transform_3, window_bounds = array<i64: 1, 1, 144>}, {transform_indices = @transform_4, window_bounds = array<i64: 1, 1, 144>}]} {
    %c0 = arith.constant 0 : index
    %c0_0 = arith.constant 0 : index
    %c0_1 = arith.constant 0 : index
    %0 = vector.load %arg1[%c0, %c0_0, %c0_1] : memref<2x18x72xbf16, #tpu.memory_space<vmem>>, vector<2x18x72xbf16>
    %1 = vector.extract_strided_slice %0 {offsets = [0, 0, 0], sizes = [1, 16, 72], strides = [1, 1, 1]} : vector<2x18x72xbf16> to vector<1x16x72xbf16>
    %2 = vector.shape_cast %1 : vector<1x16x72xbf16> to vector<16x72xbf16>
    %3 = vector.extract_strided_slice %0 {offsets = [0, 1, 0], sizes = [1, 16, 72], strides = [1, 1, 1]} : vector<2x18x72xbf16> to vector<1x16x72xbf16>
    %4 = vector.shape_cast %3 : vector<1x16x72xbf16> to vector<16x72xbf16>
    %5 = vector.extract_strided_slice %0 {offsets = [0, 2, 0], sizes = [1, 16, 72], strides = [1, 1, 1]} : vector<2x18x72xbf16> to vector<1x16x72xbf16>
    %6 = vector.shape_cast %5 : vector<1x16x72xbf16> to vector<16x72xbf16>
    %7 = tpu.concatenate %2, %4, %6 in 1 : vector<16x72xbf16>, vector<16x72xbf16>, vector<16x72xbf16> -> vector<16x216xbf16>
    %8 = vector.extract_strided_slice %0 {offsets = [1, 0, 0], sizes = [1, 16, 72], strides = [1, 1, 1]} : vector<2x18x72xbf16> to vector<1x16x72xbf16>
    %9 = vector.shape_cast %8 : vector<1x16x72xbf16> to vector<16x72xbf16>
    %10 = vector.extract_strided_slice %0 {offsets = [1, 1, 0], sizes = [1, 16, 72], strides = [1, 1, 1]} : vector<2x18x72xbf16> to vector<1x16x72xbf16>
    %11 = vector.shape_cast %10 : vector<1x16x72xbf16> to vector<16x72xbf16>
    %12 = vector.extract_strided_slice %0 {offsets = [1, 2, 0], sizes = [1, 16, 72], strides = [1, 1, 1]} : vector<2x18x72xbf16> to vector<1x16x72xbf16>
    %13 = vector.shape_cast %12 : vector<1x16x72xbf16> to vector<16x72xbf16>
    %14 = tpu.concatenate %9, %11, %13 in 1 : vector<16x72xbf16>, vector<16x72xbf16>, vector<16x72xbf16> -> vector<16x216xbf16>
    %15 = tpu.concatenate %7, %14 in 0 : vector<16x216xbf16>, vector<16x216xbf16> -> vector<32x216xbf16>
    %c0_2 = arith.constant 0 : index
    %c0_3 = arith.constant 0 : index
    %16 = vector.load %arg2[%c0_2, %c0_3] : memref<216x144xbf16, #tpu.memory_space<vmem>>, vector<216x144xbf16>
    %cst = arith.constant dense<0.000000e+00> : vector<32x144xf32>
    %17 = tpu.matmul %15, %16, %cst {dimension_numbers = #tpu.dot_dimension_numbers<[1], [0], [0], [1], [0, 0, 1, 1], [], []>} : vector<32x216xbf16>, vector<216x144xbf16>, vector<32x144xf32> -> vector<32x144xf32>
    %18 = vector.shape_cast %17 : vector<32x144xf32> to vector<2x16x144xf32>
    %19 = arith.truncf %18 : vector<2x16x144xf32> to vector<2x16x144xbf16>
    %c0_4 = arith.constant 0 : index
    %c0_5 = arith.constant 0 : index
    %c0_6 = arith.constant 0 : index
    %20 = vector.load %arg3[%c0_4, %c0_5, %c0_6] : memref<2x16x144xbf16, #tpu.memory_space<vmem>>, vector<2x16x144xbf16>
    tpu.vector_store %arg3[%c0_4, %c0_5, %c0_6], %19 {strides = array<i32>} : memref<2x16x144xbf16, #tpu.memory_space<vmem>>, vector<2x16x144xbf16>,
    %cst_7 = arith.constant dense<0.000000e+00> : vector<144xf32>
    %21 = vector.multi_reduction <add>, %17, %cst_7 [0] : vector<32x144xf32> to vector<144xf32>
    %22 = vector.shape_cast %21 : vector<144xf32> to vector<1x144xf32>
    %c0_8 = arith.constant 0 : index
    %c0_9 = arith.constant 0 : index
    %c0_10 = arith.constant 0 : index
    %23 = vector.load %arg4[%c0_8, %c0_9, %c0_10] : memref<1x1x144xf32, #tpu.memory_space<vmem>>, vector<1x1x144xf32>
    %24 = vector.shape_cast %23 : vector<1x1x144xf32> to vector<1x144xf32>
    %25 = vector.shape_cast %22 : vector<1x144xf32> to vector<1x1x144xf32>
    tpu.vector_store %arg4[%c0_8, %c0_9, %c0_10], %25 {strides = array<i32>} : memref<1x1x144xf32, #tpu.memory_space<vmem>>, vector<1x1x144xf32>,
    %26 = arith.mulf %17, %17 : vector<32x144xf32>
    %cst_11 = arith.constant dense<0.000000e+00> : vector<144xf32>
    %27 = vector.multi_reduction <add>, %26, %cst_11 [0] : vector<32x144xf32> to vector<144xf32>
    %28 = vector.shape_cast %27 : vector<144xf32> to vector<1x144xf32>
    %c0_12 = arith.constant 0 : index
    %c0_13 = arith.constant 0 : index
    %c0_14 = arith.constant 0 : index
    %29 = vector.load %arg5[%c0_12, %c0_13, %c0_14] : memref<1x1x144xf32, #tpu.memory_space<vmem>>, vector<1x1x144xf32>
    %30 = vector.shape_cast %29 : vector<1x1x144xf32> to vector<1x144xf32>
    %31 = vector.shape_cast %28 : vector<1x144xf32> to vector<1x1x144xf32>
    tpu.vector_store %arg5[%c0_12, %c0_13, %c0_14], %31 {strides = array<i32>} : memref<1x1x144xf32, #tpu.memory_space<vmem>>, vector<1x1x144xf32>,
    return
  }
  func.func @transform_0(%arg0: i32) -> (i32, i32, i32) {
    %c0_i32 = arith.constant 0 : i32
    %c0_i32_0 = arith.constant 0 : i32
    %c0_i32_1 = arith.constant 0 : i32
    return %arg0, %c0_i32, %c0_i32_0 : i32, i32, i32
  }
  func.func @transform_1(%arg0: i32) -> (i32, i32) {
    %c0_i32 = arith.constant 0 : i32
    %c0_i32_0 = arith.constant 0 : i32
    %c0_i32_1 = arith.constant 0 : i32
    return %c0_i32, %c0_i32_0 : i32, i32
  }
  func.func @transform_2(%arg0: i32) -> (i32, i32, i32) {
    %c0_i32 = arith.constant 0 : i32
    %c0_i32_0 = arith.constant 0 : i32
    %c0_i32_1 = arith.constant 0 : i32
    return %arg0, %c0_i32, %c0_i32_0 : i32, i32, i32
  }
  func.func @transform_3(%arg0: i32) -> (i32, i32, i32) {
    %c0_i32 = arith.constant 0 : i32
    %c0_i32_0 = arith.constant 0 : i32
    %c0_i32_1 = arith.constant 0 : i32
    return %arg0, %c0_i32, %c0_i32_0 : i32, i32, i32
  }
  func.func @transform_4(%arg0: i32) -> (i32, i32, i32) {
    %c0_i32 = arith.constant 0 : i32
    %c0_i32_0 = arith.constant 0 : i32
    %c0_i32_1 = arith.constant 0 : i32
    return %arg0, %c0_i32, %c0_i32_0 : i32, i32, i32
  }
}

module attributes {stable_mosaic.version = 11 : i64} {
  func.func @bn_relu_conv2_stats_kernel(%arg0: i32, %arg1: memref<2x16x144xbf16, #tpu.memory_space<vmem>>, %arg2: memref<1x144xf32, #tpu.memory_space<vmem>>, %arg3: memref<1x144xf32, #tpu.memory_space<vmem>>, %arg4: memref<432x144xbf16, #tpu.memory_space<vmem>>, %arg5: memref<2x16x128xbf16, #tpu.memory_space<vmem>>, %arg6: memref<1x1x128xf32, #tpu.memory_space<vmem>>, %arg7: memref<1x1x128xf32, #tpu.memory_space<vmem>>) attributes {dimension_semantics = [#tpu.dimension_semantics<parallel>], iteration_bounds = array<i64: 1>, scalar_prefetch = 0 : i64, scratch_operands = 0 : i64, tpu.core_type = #tpu.core_type<tc>, window_params = [{transform_indices = @transform_0, window_bounds = array<i64: 2, 16, 144>}, {pipeline_mode = #tpu.pipeline_mode<synchronous>, transform_indices = @transform_1, window_bounds = array<i64: 1, 144>}, {pipeline_mode = #tpu.pipeline_mode<synchronous>, transform_indices = @transform_2, window_bounds = array<i64: 1, 144>}, {pipeline_mode = #tpu.pipeline_mode<synchronous>, transform_indices = @transform_3, window_bounds = array<i64: 432, 144>}, {transform_indices = @transform_4, window_bounds = array<i64: 2, 16, 128>}, {transform_indices = @transform_5, window_bounds = array<i64: 1, 1, 128>}, {transform_indices = @transform_6, window_bounds = array<i64: 1, 1, 128>}]} {
    %c0 = arith.constant 0 : index
    %c0_0 = arith.constant 0 : index
    %c0_1 = arith.constant 0 : index
    %0 = vector.load %arg1[%c0, %c0_0, %c0_1] : memref<2x16x144xbf16, #tpu.memory_space<vmem>>, vector<2x16x144xbf16>
    %1 = vector.shape_cast %0 : vector<2x16x144xbf16> to vector<32x144xbf16>
    %2 = arith.extf %1 : vector<32x144xbf16> to vector<32x144xf32>
    %c0_2 = arith.constant 0 : index
    %c0_3 = arith.constant 0 : index
    %3 = vector.load %arg2[%c0_2, %c0_3] : memref<1x144xf32, #tpu.memory_space<vmem>>, vector<1x144xf32>
    %4 = vector.broadcast %3 : vector<1x144xf32> to vector<32x144xf32>
    %5 = arith.mulf %2, %4 : vector<32x144xf32>
    %c0_4 = arith.constant 0 : index
    %c0_5 = arith.constant 0 : index
    %6 = vector.load %arg3[%c0_4, %c0_5] : memref<1x144xf32, #tpu.memory_space<vmem>>, vector<1x144xf32>
    %7 = vector.broadcast %6 : vector<1x144xf32> to vector<32x144xf32>
    %8 = arith.addf %5, %7 : vector<32x144xf32>
    %cst = arith.constant 0.000000e+00 : f32
    %9 = vector.broadcast %cst : f32 to vector<32x144xf32>
    %10 = arith.maximumf %8, %9 : vector<32x144xf32>
    %11 = arith.truncf %10 : vector<32x144xf32> to vector<32x144xbf16>
    %cst_6 = arith.constant 0.000000e+00 : bf16
    %12 = vector.broadcast %cst_6 : bf16 to vector<1x144xbf16>
    %13 = vector.extract_strided_slice %11 {offsets = [0, 0], sizes = [16, 144], strides = [1, 1]} : vector<32x144xbf16> to vector<16x144xbf16>
    %14 = vector.extract_strided_slice %13 {offsets = [0, 0], sizes = [15, 144], strides = [1, 1]} : vector<16x144xbf16> to vector<15x144xbf16>
    %15 = tpu.concatenate %12, %14 in 0 : vector<1x144xbf16>, vector<15x144xbf16> -> vector<16x144xbf16>
    %16 = vector.extract_strided_slice %13 {offsets = [1, 0], sizes = [15, 144], strides = [1, 1]} : vector<16x144xbf16> to vector<15x144xbf16>
    %17 = tpu.concatenate %16, %12 in 0 : vector<15x144xbf16>, vector<1x144xbf16> -> vector<16x144xbf16>
    %18 = tpu.concatenate %15, %13, %17 in 1 : vector<16x144xbf16>, vector<16x144xbf16>, vector<16x144xbf16> -> vector<16x432xbf16>
    %19 = vector.extract_strided_slice %11 {offsets = [16, 0], sizes = [16, 144], strides = [1, 1]} : vector<32x144xbf16> to vector<16x144xbf16>
    %20 = vector.extract_strided_slice %19 {offsets = [0, 0], sizes = [15, 144], strides = [1, 1]} : vector<16x144xbf16> to vector<15x144xbf16>
    %21 = tpu.concatenate %12, %20 in 0 : vector<1x144xbf16>, vector<15x144xbf16> -> vector<16x144xbf16>
    %22 = vector.extract_strided_slice %19 {offsets = [1, 0], sizes = [15, 144], strides = [1, 1]} : vector<16x144xbf16> to vector<15x144xbf16>
    %23 = tpu.concatenate %22, %12 in 0 : vector<15x144xbf16>, vector<1x144xbf16> -> vector<16x144xbf16>
    %24 = tpu.concatenate %21, %19, %23 in 1 : vector<16x144xbf16>, vector<16x144xbf16>, vector<16x144xbf16> -> vector<16x432xbf16>
    %25 = tpu.concatenate %18, %24 in 0 : vector<16x432xbf16>, vector<16x432xbf16> -> vector<32x432xbf16>
    %c0_7 = arith.constant 0 : index
    %c0_8 = arith.constant 0 : index
    %26 = vector.load %arg4[%c0_7, %c0_8] : memref<432x144xbf16, #tpu.memory_space<vmem>>, vector<432x144xbf16>
    %cst_9 = arith.constant dense<0.000000e+00> : vector<32x144xf32>
    %27 = tpu.matmul %25, %26, %cst_9 {dimension_numbers = #tpu.dot_dimension_numbers<[1], [0], [0], [1], [0, 0, 1, 1], [], []>} : vector<32x432xbf16>, vector<432x144xbf16>, vector<32x144xf32> -> vector<32x144xf32>
    %28 = vector.extract_strided_slice %27 {offsets = [0, 8], sizes = [32, 128], strides = [1, 1]} : vector<32x144xf32> to vector<32x128xf32>
    %29 = vector.shape_cast %28 : vector<32x128xf32> to vector<2x16x128xf32>
    %30 = arith.truncf %29 : vector<2x16x128xf32> to vector<2x16x128xbf16>
    %c0_10 = arith.constant 0 : index
    %c0_11 = arith.constant 0 : index
    %c0_12 = arith.constant 0 : index
    %31 = vector.load %arg5[%c0_10, %c0_11, %c0_12] : memref<2x16x128xbf16, #tpu.memory_space<vmem>>, vector<2x16x128xbf16>
    tpu.vector_store %arg5[%c0_10, %c0_11, %c0_12], %30 {strides = array<i32>} : memref<2x16x128xbf16, #tpu.memory_space<vmem>>, vector<2x16x128xbf16>,
    %cst_13 = arith.constant dense<0.000000e+00> : vector<128xf32>
    %32 = vector.multi_reduction <add>, %28, %cst_13 [0] : vector<32x128xf32> to vector<128xf32>
    %33 = vector.shape_cast %32 : vector<128xf32> to vector<1x128xf32>
    %c0_14 = arith.constant 0 : index
    %c0_15 = arith.constant 0 : index
    %c0_16 = arith.constant 0 : index
    %34 = vector.load %arg6[%c0_14, %c0_15, %c0_16] : memref<1x1x128xf32, #tpu.memory_space<vmem>>, vector<1x1x128xf32>
    %35 = vector.shape_cast %34 : vector<1x1x128xf32> to vector<1x128xf32>
    %36 = vector.shape_cast %33 : vector<1x128xf32> to vector<1x1x128xf32>
    tpu.vector_store %arg6[%c0_14, %c0_15, %c0_16], %36 {strides = array<i32>} : memref<1x1x128xf32, #tpu.memory_space<vmem>>, vector<1x1x128xf32>,
    %37 = arith.mulf %28, %28 : vector<32x128xf32>
    %cst_17 = arith.constant dense<0.000000e+00> : vector<128xf32>
    %38 = vector.multi_reduction <add>, %37, %cst_17 [0] : vector<32x128xf32> to vector<128xf32>
    %39 = vector.shape_cast %38 : vector<128xf32> to vector<1x128xf32>
    %c0_18 = arith.constant 0 : index
    %c0_19 = arith.constant 0 : index
    %c0_20 = arith.constant 0 : index
    %40 = vector.load %arg7[%c0_18, %c0_19, %c0_20] : memref<1x1x128xf32, #tpu.memory_space<vmem>>, vector<1x1x128xf32>
    %41 = vector.shape_cast %40 : vector<1x1x128xf32> to vector<1x128xf32>
    %42 = vector.shape_cast %39 : vector<1x128xf32> to vector<1x1x128xf32>
    tpu.vector_store %arg7[%c0_18, %c0_19, %c0_20], %42 {strides = array<i32>} : memref<1x1x128xf32, #tpu.memory_space<vmem>>, vector<1x1x128xf32>,
    return
  }
  func.func @transform_0(%arg0: i32) -> (i32, i32, i32) {
    %c0_i32 = arith.constant 0 : i32
    %c0_i32_0 = arith.constant 0 : i32
    %c0_i32_1 = arith.constant 0 : i32
    return %arg0, %c0_i32, %c0_i32_0 : i32, i32, i32
  }
  func.func @transform_1(%arg0: i32) -> (i32, i32) {
    %c0_i32 = arith.constant 0 : i32
    %c0_i32_0 = arith.constant 0 : i32
    %c0_i32_1 = arith.constant 0 : i32
    return %c0_i32, %c0_i32_0 : i32, i32
  }
  func.func @transform_2(%arg0: i32) -> (i32, i32) {
    %c0_i32 = arith.constant 0 : i32
    %c0_i32_0 = arith.constant 0 : i32
    %c0_i32_1 = arith.constant 0 : i32
    return %c0_i32, %c0_i32_0 : i32, i32
  }
  func.func @transform_3(%arg0: i32) -> (i32, i32) {
    %c0_i32 = arith.constant 0 : i32
    %c0_i32_0 = arith.constant 0 : i32
    %c0_i32_1 = arith.constant 0 : i32
    return %c0_i32, %c0_i32_0 : i32, i32
  }
  func.func @transform_4(%arg0: i32) -> (i32, i32, i32) {
    %c0_i32 = arith.constant 0 : i32
    %c0_i32_0 = arith.constant 0 : i32
    %c0_i32_1 = arith.constant 0 : i32
    return %arg0, %c0_i32, %c0_i32_0 : i32, i32, i32
  }
  func.func @transform_5(%arg0: i32) -> (i32, i32, i32) {
    %c0_i32 = arith.constant 0 : i32
    %c0_i32_0 = arith.constant 0 : i32
    %c0_i32_1 = arith.constant 0 : i32
    return %arg0, %c0_i32, %c0_i32_0 : i32, i32, i32
  }
  func.func @transform_6(%arg0: i32) -> (i32, i32, i32) {
    %c0_i32 = arith.constant 0 : i32
    %c0_i32_0 = arith.constant 0 : i32
    %c0_i32_1 = arith.constant 0 : i32
    return %arg0, %c0_i32, %c0_i32_0 : i32, i32, i32
  }
}

module attributes {stable_mosaic.version = 11 : i64} {
  func.func @bn_relu_kernel(%arg0: i32, %arg1: memref<2x16x128xbf16, #tpu.memory_space<vmem>>, %arg2: memref<1x128xf32, #tpu.memory_space<vmem>>, %arg3: memref<1x128xf32, #tpu.memory_space<vmem>>, %arg4: memref<2x16x128xf32, #tpu.memory_space<vmem>>) attributes {dimension_semantics = [#tpu.dimension_semantics<parallel>], iteration_bounds = array<i64: 1>, scalar_prefetch = 0 : i64, scratch_operands = 0 : i64, tpu.core_type = #tpu.core_type<tc>, window_params = [{transform_indices = @transform_0, window_bounds = array<i64: 2, 16, 128>}, {pipeline_mode = #tpu.pipeline_mode<synchronous>, transform_indices = @transform_1, window_bounds = array<i64: 1, 128>}, {pipeline_mode = #tpu.pipeline_mode<synchronous>, transform_indices = @transform_2, window_bounds = array<i64: 1, 128>}, {transform_indices = @transform_3, window_bounds = array<i64: 2, 16, 128>}]} {
    %c0 = arith.constant 0 : index
    %c0_0 = arith.constant 0 : index
    %c0_1 = arith.constant 0 : index
    %0 = vector.load %arg1[%c0, %c0_0, %c0_1] : memref<2x16x128xbf16, #tpu.memory_space<vmem>>, vector<2x16x128xbf16>
    %1 = vector.shape_cast %0 : vector<2x16x128xbf16> to vector<32x128xbf16>
    %2 = arith.extf %1 : vector<32x128xbf16> to vector<32x128xf32>
    %c0_2 = arith.constant 0 : index
    %c0_3 = arith.constant 0 : index
    %3 = vector.load %arg2[%c0_2, %c0_3] : memref<1x128xf32, #tpu.memory_space<vmem>>, vector<1x128xf32>
    %4 = vector.broadcast %3 : vector<1x128xf32> to vector<32x128xf32>
    %5 = arith.mulf %2, %4 : vector<32x128xf32>
    %c0_4 = arith.constant 0 : index
    %c0_5 = arith.constant 0 : index
    %6 = vector.load %arg3[%c0_4, %c0_5] : memref<1x128xf32, #tpu.memory_space<vmem>>, vector<1x128xf32>
    %7 = vector.broadcast %6 : vector<1x128xf32> to vector<32x128xf32>
    %8 = arith.addf %5, %7 : vector<32x128xf32>
    %cst = arith.constant 0.000000e+00 : f32
    %9 = vector.broadcast %cst : f32 to vector<32x128xf32>
    %10 = arith.maximumf %8, %9 : vector<32x128xf32>
    %11 = vector.shape_cast %10 : vector<32x128xf32> to vector<2x16x128xf32>
    %c0_6 = arith.constant 0 : index
    %c0_7 = arith.constant 0 : index
    %c0_8 = arith.constant 0 : index
    %12 = vector.load %arg4[%c0_6, %c0_7, %c0_8] : memref<2x16x128xf32, #tpu.memory_space<vmem>>, vector<2x16x128xf32>
    tpu.vector_store %arg4[%c0_6, %c0_7, %c0_8], %11 {strides = array<i32>} : memref<2x16x128xf32, #tpu.memory_space<vmem>>, vector<2x16x128xf32>,
    return
  }
  func.func @transform_0(%arg0: i32) -> (i32, i32, i32) {
    %c0_i32 = arith.constant 0 : i32
    %c0_i32_0 = arith.constant 0 : i32
    %c0_i32_1 = arith.constant 0 : i32
    return %arg0, %c0_i32, %c0_i32_0 : i32, i32, i32
  }
  func.func @transform_1(%arg0: i32) -> (i32, i32) {
    %c0_i32 = arith.constant 0 : i32
    %c0_i32_0 = arith.constant 0 : i32
    %c0_i32_1 = arith.constant 0 : i32
    return %c0_i32, %c0_i32_0 : i32, i32
  }
  func.func @transform_2(%arg0: i32) -> (i32, i32) {
    %c0_i32 = arith.constant 0 : i32
    %c0_i32_0 = arith.constant 0 : i32
    %c0_i32_1 = arith.constant 0 : i32
    return %c0_i32, %c0_i32_0 : i32, i32
  }
  func.func @transform_3(%arg0: i32) -> (i32, i32, i32) {
    %c0_i32 = arith.constant 0 : i32
    %c0_i32_0 = arith.constant 0 : i32
    %c0_i32_1 = arith.constant 0 : i32
    return %arg0, %c0_i32, %c0_i32_0 : i32, i32, i32
  }
}

</mosaic_0001>

<llo_original>
// kernel: tile.23
$region0: #{tile.23}
  #allocation0 [shape = 's32[1]{0}', space=sflag, size = 0x4, scoped, tag = 'scoped memory for tile.23']
  %s0 = inlined_call_operand.vmem [shape: f32[8], index: 0, kind: input, shape index: {}]
  %s1 = inlined_call_operand.vmem [shape: f32[16,8], index: 1, kind: output, shape index: {}]
  // Predicated region
  $region2: #{tile.23} parent=0 // pred_check
    _
  $region3: #{tile.23} parent=0 // pred_check_branch
    %3 = sbr.rel (0) target = $region5
  $region4: #{tile.23} parent=0 // pred_region
    _
  $region5: #{tile.23} parent=0 // pred_fallthru
    _
  %v4 = vld [vmem:[%s0] ss:$0 sm:$0xff]
  %5 = vst [vmem:[%s1] sm:$0xff] %v4
  %s6 = scalar_lea.vmem %s1, 8
  %7 = vst [vmem:[%s6] sm:$0xff] %v4

// kernel: tile.24
$region0: #{tile.24}
  %s0 = inlined_call_operand.vmem [shape: f32[16,8], index: 0, kind: input, shape index: {}]
  %s1 = inlined_call_operand.vmem [shape: f32[128], index: 1, kind: output, shape index: {}]
  $region1: #{tile.24} parent=0
    #allocation0 [shape = 'u8[4096]{0}', space=vmem, size = 0x1000, scoped, tag = 'scoped mem for output reshape']
    %v2 = vld [vmem:[%s0] sm:$0x1]
    %vm3 = vcmask 64512
    %4 = vst.msk [vmem:[#allocation0] sm:$0x1] %vm3, %v2
    %s5 = scalar_lea.vmem %s0, 15
    %v6 = vld [vmem:[%s5] sm:$0x1]
    %7 = vrot.lane.b32.xlu0 %v6, 120
    %v8 = vpop.permute.xlu0 %7
    %vm9 = vcmask 1048512
    %10 = vst.msk [vmem:[#allocation0] sm:$0x1] %vm9, %v8
    %s11 = scalar_lea.vmem %s0, 14
    %v12 = vld [vmem:[%s11] sm:$0x1]
    %13 = vrot.lane.b32.xlu0 %v12, 112
    %v14 = vpop.permute.xlu0 %13
    %vm15 = vcmask 982912
    %16 = vst.msk [vmem:[#allocation0] sm:$0x1] %vm15, %v14
    %s17 = scalar_lea.vmem %s0, 13
    %v18 = vld [vmem:[%s17] sm:$0x1]
    %19 = vrot.lane.b32.xlu0 %v18, 104
    %v20 = vpop.permute.xlu0 %19
    %vm21 = vcmask 917312
    %22 = vst.msk [vmem:[#allocation0] sm:$0x1] %vm21, %v20
    %s23 = scalar_lea.vmem %s0, 12
    %v24 = vld [vmem:[%s23] sm:$0x1]
    %25 = vrot.lane.b32.xlu0 %v24, 96
    %v26 = vpop.permute.xlu0 %25
    %vm27 = vcmask 851712
    %28 = vst.msk [vmem:[#allocation0] sm:$0x1] %vm27, %v26
    %s29 = scalar_lea.vmem %s0, 11
    %v30 = vld [vmem:[%s29] sm:$0x1]
    %31 = vrot.lane.b32.xlu0 %v30, 88
    %v32 = vpop.permute.xlu0 %31
    %vm33 = vcmask 786112
    %34 = vst.msk [vmem:[#allocation0] sm:$0x1] %vm33, %v32
    %s35 = scalar_lea.vmem %s0, 10
    %v36 = vld [vmem:[%s35] sm:$0x1]
    %37 = vrot.lane.b32.xlu0 %v36, 80
    %v38 = vpop.permute.xlu0 %37
    %vm39 = vcmask 720512
    %40 = vst.msk [vmem:[#allocation0] sm:$0x1] %vm39, %v38
    %s41 = scalar_lea.vmem %s0, 9
    %v42 = vld [vmem:[%s41] sm:$0x1]
    %43 = vrot.lane.b32.xlu0 %v42, 72
    %v44 = vpop.permute.xlu0 %43
    %vm45 = vcmask 654912
    %46 = vst.msk [vmem:[#allocation0] sm:$0x1] %vm45, %v44
    %s47 = scalar_lea.vmem %s0, 8
    %v48 = vld [vmem:[%s47] sm:$0x1]
    %49 = vrot.lane.b32.xlu0 %v48, 64
    %v50 = vpop.permute.xlu0 %49
    %vm51 = vcmask 589312
    %52 = vst.msk [vmem:[#allocation0] sm:$0x1] %vm51, %v50
    %s53 = scalar_lea.vmem %s0, 7
    %v54 = vld [vmem:[%s53] sm:$0x1]
    %55 = vrot.lane.b32.xlu0 %v54, 56
    %v56 = vpop.permute.xlu0 %55
    %vm57 = vcmask 523712
    %58 = vst.msk [vmem:[#allocation0] sm:$0x1] %vm57, %v56
    %s59 = scalar_lea.vmem %s0, 6
    %v60 = vld [vmem:[%s59] sm:$0x1]
    %61 = vrot.lane.b32.xlu0 %v60, 48
    %v62 = vpop.permute.xlu0 %61
    %vm63 = vcmask 458112
    %64 = vst.msk [vmem:[#allocation0] sm:$0x1] %vm63, %v62
    %s65 = scalar_lea.vmem %s0, 5
    %v66 = vld [vmem:[%s65] sm:$0x1]
    %67 = vrot.lane.b32.xlu0 %v66, 40
    %v68 = vpop.permute.xlu0 %67
    %vm69 = vcmask 392512
    %70 = vst.msk [vmem:[#allocation0] sm:$0x1] %vm69, %v68
    %s71 = scalar_lea.vmem %s0, 4
    %v72 = vld [vmem:[%s71] sm:$0x1]
    %73 = vrot.lane.b32.xlu0 %v72, 32
    %v74 = vpop.permute.xlu0 %73
    %vm75 = vcmask 326912
    %76 = vst.msk [vmem:[#allocation0] sm:$0x1] %vm75, %v74
    %s77 = scalar_lea.vmem %s0, 3
    %v78 = vld [vmem:[%s77] sm:$0x1]
    %79 = vrot.lane.b32.xlu0 %v78, 24
    %v80 = vpop.permute.xlu0 %79
    %vm81 = vcmask 261312
    %82 = vst.msk [vmem:[#allocation0] sm:$0x1] %vm81, %v80
    %s83 = scalar_lea.vmem %s0, 2
    %v84 = vld [vmem:[%s83] sm:$0x1]
    %85 = vrot.lane.b32.xlu0 %v84, 16
    %v86 = vpop.permute.xlu0 %85
    %vm87 = vcmask 195712
    %88 = vst.msk [vmem:[#allocation0] sm:$0x1] %vm87, %v86
    %s89 = scalar_lea.vmem %s0, 1
    %v90 = vld [vmem:[%s89] sm:$0x1]
    %91 = vrot.lane.b32.xlu0 %v90, 8
    %v92 = vpop.permute.xlu0 %91
    %vm93 = vcmask 130112
    %94 = vst.msk [vmem:[#allocation0] sm:$0x1] %vm93, %v92
    %s96 = sshll.u32 1, 1
    %s97 = ssub.s32 %s96, 1
    %v99 = vld [vmem:[#allocation0] sm:%s97]
    %s100 = sshll.u32 1, 1
    %s101 = ssub.s32 %s100, 1
    %102 = vst [vmem:[%s1] sm:%s101] %v99

// kernel: tile.38
$region0: #{tile.38}
  %s0 = inlined_call_operand.vmem [shape: f32[16,8], index: 0, kind: input, shape index: {}]
  %s1 = inlined_call_operand.vmem [shape: f32[1,128], index: 1, kind: output, shape index: {}]
  $region1: #{tile.38} parent=0
    #allocation0 [shape = 'u8[4096]{0}', space=vmem, size = 0x1000, scoped, tag = 'scoped mem for output reshape']
    %v2 = vld [vmem:[%s0] sm:$0x1]
    %vm3 = vcmask 64512
    %4 = vst.msk [vmem:[#allocation0] sm:$0x1] %vm3, %v2
    %s5 = scalar_lea.vmem %s0, 15
    %v6 = vld [vmem:[%s5] sm:$0x1]
    %7 = vrot.lane.b32.xlu0 %v6, 120
    %v8 = vpop.permute.xlu0 %7
    %vm9 = vcmask 1048512
    %10 = vst.msk [vmem:[#allocation0] sm:$0x1] %vm9, %v8
    %s11 = scalar_lea.vmem %s0, 14
    %v12 = vld [vmem:[%s11] sm:$0x1]
    %13 = vrot.lane.b32.xlu0 %v12, 112
    %v14 = vpop.permute.xlu0 %13
    %vm15 = vcmask 982912
    %16 = vst.msk [vmem:[#allocation0] sm:$0x1] %vm15, %v14
    %s17 = scalar_lea.vmem %s0, 13
    %v18 = vld [vmem:[%s17] sm:$0x1]
    %19 = vrot.lane.b32.xlu0 %v18, 104
    %v20 = vpop.permute.xlu0 %19
    %vm21 = vcmask 917312
    %22 = vst.msk [vmem:[#allocation0] sm:$0x1] %vm21, %v20
    %s23 = scalar_lea.vmem %s0, 12
    %v24 = vld [vmem:[%s23] sm:$0x1]
    %25 = vrot.lane.b32.xlu0 %v24, 96
    %v26 = vpop.permute.xlu0 %25
    %vm27 = vcmask 851712
    %28 = vst.msk [vmem:[#allocation0] sm:$0x1] %vm27, %v26
    %s29 = scalar_lea.vmem %s0, 11
    %v30 = vld [vmem:[%s29] sm:$0x1]
    %31 = vrot.lane.b32.xlu0 %v30, 88
    %v32 = vpop.permute.xlu0 %31
    %vm33 = vcmask 786112
    %34 = vst.msk [vmem:[#allocation0] sm:$0x1] %vm33, %v32
    %s35 = scalar_lea.vmem %s0, 10
    %v36 = vld [vmem:[%s35] sm:$0x1]
    %37 = vrot.lane.b32.xlu0 %v36, 80
    %v38 = vpop.permute.xlu0 %37
    %vm39 = vcmask 720512
    %40 = vst.msk [vmem:[#allocation0] sm:$0x1] %vm39, %v38
    %s41 = scalar_lea.vmem %s0, 9
    %v42 = vld [vmem:[%s41] sm:$0x1]
    %43 = vrot.lane.b32.xlu0 %v42, 72
    %v44 = vpop.permute.xlu0 %43
    %vm45 = vcmask 654912
    %46 = vst.msk [vmem:[#allocation0] sm:$0x1] %vm45, %v44
    %s47 = scalar_lea.vmem %s0, 8
    %v48 = vld [vmem:[%s47] sm:$0x1]
    %49 = vrot.lane.b32.xlu0 %v48, 64
    %v50 = vpop.permute.xlu0 %49
    %vm51 = vcmask 589312
    %52 = vst.msk [vmem:[#allocation0] sm:$0x1] %vm51, %v50
    %s53 = scalar_lea.vmem %s0, 7
    %v54 = vld [vmem:[%s53] sm:$0x1]
    %55 = vrot.lane.b32.xlu0 %v54, 56
    %v56 = vpop.permute.xlu0 %55
    %vm57 = vcmask 523712
    %58 = vst.msk [vmem:[#allocation0] sm:$0x1] %vm57, %v56
    %s59 = scalar_lea.vmem %s0, 6
    %v60 = vld [vmem:[%s59] sm:$0x1]
    %61 = vrot.lane.b32.xlu0 %v60, 48
    %v62 = vpop.permute.xlu0 %61
    %vm63 = vcmask 458112
    %64 = vst.msk [vmem:[#allocation0] sm:$0x1] %vm63, %v62
    %s65 = scalar_lea.vmem %s0, 5
    %v66 = vld [vmem:[%s65] sm:$0x1]
    %67 = vrot.lane.b32.xlu0 %v66, 40
    %v68 = vpop.permute.xlu0 %67
    %vm69 = vcmask 392512
    %70 = vst.msk [vmem:[#allocation0] sm:$0x1] %vm69, %v68
    %s71 = scalar_lea.vmem %s0, 4
    %v72 = vld [vmem:[%s71] sm:$0x1]
    %73 = vrot.lane.b32.xlu0 %v72, 32
    %v74 = vpop.permute.xlu0 %73
    %vm75 = vcmask 326912
    %76 = vst.msk [vmem:[#allocation0] sm:$0x1] %vm75, %v74
    %s77 = scalar_lea.vmem %s0, 3
    %v78 = vld [vmem:[%s77] sm:$0x1]
    %79 = vrot.lane.b32.xlu0 %v78, 24
    %v80 = vpop.permute.xlu0 %79
    %vm81 = vcmask 261312
    %82 = vst.msk [vmem:[#allocation0] sm:$0x1] %vm81, %v80
    %s83 = scalar_lea.vmem %s0, 2
    %v84 = vld [vmem:[%s83] sm:$0x1]
    %85 = vrot.lane.b32.xlu0 %v84, 16
    %v86 = vpop.permute.xlu0 %85
    %vm87 = vcmask 195712
    %88 = vst.msk [vmem:[#allocation0] sm:$0x1] %vm87, %v86
    %s89 = scalar_lea.vmem %s0, 1
    %v90 = vld [vmem:[%s89] sm:$0x1]
    %91 = vrot.lane.b32.xlu0 %v90, 8
    %v92 = vpop.permute.xlu0 %91
    %vm93 = vcmask 130112
    %94 = vst.msk [vmem:[#allocation0] sm:$0x1] %vm93, %v92
    %s96 = sshll.u32 1, 1
    %s97 = ssub.s32 %s96, 1
    %v99 = vld [vmem:[#allocation0] sm:%s97]
    %s100 = sshll.u32 1, 1
    %s101 = ssub.s32 %s100, 1
    %102 = vst [vmem:[%s1] sm:%s101] %v99

// kernel: double_conv.3
$region0: #{double_conv.3}
  #allocation0 [shape = 'u32[]', space=smem, size = 0x4, offset = 0x4, fixed_abs, tag = 'smem constant byte address 0x4 - core index']
  #allocation1 [shape = 'u32[144,128]{1,0:T(1,128)}', space=vmem, size = 0x12000, scoped, tag = 'internal scratch']
  %s0 = inlined_call_operand.vmem [shape: bf16[2,18,72], index: 0, kind: input, shape index: {}]
  %s1 = inlined_call_operand.vmem [shape: bf16[216,144], index: 1, kind: input, shape index: {}]
  %s2 = inlined_call_operand.vmem [shape: bf16[2,16,144], index: 2, kind: output, shape index: {0}]
  %s3 = inlined_call_operand.vmem [shape: f32[1,1,144], index: 3, kind: output, shape index: {1}]
  %s4 = inlined_call_operand.vmem [shape: f32[1,1,144], index: 4, kind: output, shape index: {2}]
  %5 = xla_tuple %s2, %s3, %s4
  %s6 = sld [smem:[#allocation0]]
  $region34: #{double_conv.3} parent=0
    _
  %s8 = ssub.s32 1, %s6
  %s9 = scalar_select 0, %s8, %s6
  // Predicated region
  $region2: #{double_conv.3} parent=0 // pred_check
    _
  $region3: #{double_conv.3} parent=0 // pred_check_branch
    %11 = sbr.rel (0) target = $region5
  $region4: #{double_conv.3} parent=0 // pred_region
    _
  $region5: #{double_conv.3} parent=0 // pred_fallthru
    _
  // Predicated region
  $region6: #{double_conv.3} parent=0 // pred_check
    _
  $region7: #{double_conv.3} parent=0 // pred_check_branch
    %13 = sbr.rel (0) target = $region9
  $region8: #{double_conv.3} parent=0 // pred_region
    _
  $region9: #{double_conv.3} parent=0 // pred_fallthru
    _
  %v15 = vld [vmem:[%s0] sm:$0xf]
  %v16 = vld [vmem:[%s0 + $0x4] sm:$0xf]
  %v17 = vld [vmem:[%s0 + $0x8] sm:$0x1]
  %v18 = vld [vmem:[%s0 + $0xc] sm:$0xf]
  %v19 = vld [vmem:[%s0 + $0x10] sm:$0xf]
  %v20 = vld [vmem:[%s0 + $0x14] sm:$0x1]
  %v23 = vunpack.c.l.b16 %v15
  %v24 = vunpack.c.l.b16 %v16
  %v25 = vpack.c.b16 %v24, %v23
  %v27 = vunpack.c.l.b16 %v17
  %v28 = vpack.c.b16 %v27, %v27
  %vm29 = vsmask.f32 7424
  %v31 = vshrl.u32 %v25, 16
  %v33 = vshll.u32 %v25, 16
  %v35 = vrot.slane %v33, 1
  %v36 = vor.u32 %v31, %v35
  %v38 = vshll.u32 %v28, 16
  %v40 = vrot.slane %v38, 1
  %v41 = vsel %vm29, %v36, %v40
  %42 = vrot.lane.b32.xlu0 %v41, 72
  %v43 = vpop.permute.xlu0 %42
  %vm44 = vcmask 1046528
  %v45 = vrot.slane %v25, 1
  %v46 = vrot.slane %v28, 1
  %v47 = vsel %vm44, %v45, %v46
  %48 = vrot.lane.b32.xlu0 %v47, 16
  %v49 = vpop.permute.xlu0 %48
  %vm50 = vcmask 588800
  %v52 = vsel %vm50, %v25, %v43
  %vm54 = vcmask 130048
  %v56 = vsel %vm54, %v43, %v49
  %v59 = vunpack.c.l.b16 %v18
  %v60 = vunpack.c.l.b16 %v19
  %v61 = vpack.c.b16 %v60, %v59
  %v63 = vunpack.c.l.b16 %v20
  %v64 = vpack.c.b16 %v63, %v63
  %v66 = vshrl.u32 %v61, 16
  %v68 = vshll.u32 %v61, 16
  %v70 = vrot.slane %v68, 1
  %v71 = vor.u32 %v66, %v70
  %v73 = vshll.u32 %v64, 16
  %v75 = vrot.slane %v73, 1
  %v76 = vsel %vm29, %v71, %v75
  %77 = vrot.lane.b32.xlu0 %v76, 72
  %v78 = vpop.permute.xlu0 %77
  %v79 = vrot.slane %v61, 1
  %v80 = vrot.slane %v64, 1
  %v81 = vsel %vm44, %v79, %v80
  %82 = vrot.lane.b32.xlu0 %v81, 16
  %v83 = vpop.permute.xlu0 %82
  %v85 = vsel %vm50, %v61, %v78
  %v88 = vsel %vm54, %v78, %v83
  %v89 = vld [vmem:[%s1] sm:$0xff]
  %v90 = vld [vmem:[%s1 + $0x8] sm:$0xff]
  %v91 = vld [vmem:[%s1 + $0x10] sm:$0xff]
  %v92 = vld [vmem:[%s1 + $0x18] sm:$0xff]
  %v93 = vld [vmem:[%s1 + $0x20] sm:$0xff]
  %v94 = vld [vmem:[%s1 + $0x28] sm:$0xff]
  %v95 = vld [vmem:[%s1 + $0x30] sm:$0xff]
  %v96 = vld [vmem:[%s1 + $0x38] sm:$0xff]
  %v97 = vld [vmem:[%s1 + $0x40] sm:$0xff]
  %v98 = vld [vmem:[%s1 + $0x48] sm:$0xff]
  %v99 = vld [vmem:[%s1 + $0x50] sm:$0xff]
  %v100 = vld [vmem:[%s1 + $0x58] sm:$0xff]
  %v101 = vld [vmem:[%s1 + $0x60] sm:$0xff]
  %v102 = vld [vmem:[%s1 + $0x68] sm:$0xff]
  %v103 = vld [vmem:[%s1 + $0x70] sm:$0xff]
  %v104 = vld [vmem:[%s1 + $0x78] sm:$0xff]
  %v105 = vld [vmem:[%s1 + $0x80] sm:$0xff]
  %v106 = vld [vmem:[%s1 + $0x88] sm:$0xff]
  %v107 = vld [vmem:[%s1 + $0x90] sm:$0xff]
  %v108 = vld [vmem:[%s1 + $0x98] sm:$0xff]
  %v109 = vld [vmem:[%s1 + $0xa0] sm:$0xff]
  %v110 = vld [vmem:[%s1 + $0xa8] sm:$0xff]
  %v111 = vld [vmem:[%s1 + $0xb0] sm:$0xff]
  %v112 = vld [vmem:[%s1 + $0xb8] sm:$0xff]
  %v113 = vld [vmem:[%s1 + $0xc0] sm:$0xff]
  %v114 = vld [vmem:[%s1 + $0xc8] sm:$0xff]
  %v115 = vld [vmem:[%s1 + $0xd0] sm:$0xff]
  %v143 = vunpack.c.l.b16 %v89
  %v144 = vunpack.c.h.b16 %v89
  %v145 = vunpack.c.l.b16 %v90
  %v146 = vunpack.c.h.b16 %v90
  %v147 = vunpack.c.l.b16 %v91
  %v148 = vunpack.c.h.b16 %v91
  %v149 = vunpack.c.l.b16 %v92
  %v150 = vunpack.c.h.b16 %v92
  %v151 = vunpack.c.l.b16 %v93
  %v152 = vunpack.c.h.b16 %v93
  %v153 = vunpack.c.l.b16 %v94
  %v154 = vunpack.c.h.b16 %v94
  %v155 = vunpack.c.l.b16 %v95
  %v156 = vunpack.c.h.b16 %v95
  %v157 = vunpack.c.l.b16 %v96
  %v158 = vunpack.c.h.b16 %v96
  %v159 = vunpack.c.l.b16 %v97
  %v160 = vunpack.c.h.b16 %v97
  %v161 = vunpack.c.l.b16 %v98
  %v162 = vunpack.c.h.b16 %v98
  %v163 = vunpack.c.l.b16 %v99
  %v164 = vunpack.c.h.b16 %v99
  %v165 = vunpack.c.l.b16 %v100
  %v166 = vunpack.c.h.b16 %v100
  %v167 = vunpack.c.l.b16 %v101
  %v168 = vunpack.c.h.b16 %v101
  %v169 = vunpack.c.l.b16 %v102
  %v170 = vunpack.c.h.b16 %v102
  %v171 = vunpack.c.l.b16 %v103
  %v172 = vunpack.c.h.b16 %v103
  %v173 = vunpack.c.l.b16 %v104
  %v174 = vunpack.c.h.b16 %v104
  %v175 = vunpack.c.l.b16 %v105
  %v176 = vunpack.c.h.b16 %v105
  %v177 = vunpack.c.l.b16 %v106
  %v178 = vunpack.c.h.b16 %v106
  %v179 = vunpack.c.l.b16 %v107
  %v180 = vunpack.c.h.b16 %v107
  %v181 = vunpack.c.l.b16 %v108
  %v182 = vunpack.c.h.b16 %v108
  %v183 = vunpack.c.l.b16 %v109
  %v184 = vunpack.c.h.b16 %v109
  %v185 = vunpack.c.l.b16 %v110
  %v186 = vunpack.c.h.b16 %v110
  %v187 = vunpack.c.l.b16 %v111
  %v188 = vunpack.c.h.b16 %v111
  %v189 = vunpack.c.l.b16 %v112
  %v190 = vunpack.c.h.b16 %v112
  %v191 = vunpack.c.l.b16 %v113
  %v192 = vunpack.c.h.b16 %v113
  %v193 = vunpack.c.l.b16 %v114
  %v194 = vunpack.c.h.b16 %v114
  %v195 = vunpack.c.l.b16 %v115
  %v196 = vunpack.c.h.b16 %v115
  %v197 = vpack.c.b16 %v145, %v143
  %v198 = vpack.c.b16 %v146, %v144
  %v199 = vpack.c.b16 %v149, %v147
  %v200 = vpack.c.b16 %v150, %v148
  %v201 = vpack.c.b16 %v153, %v151
  %v202 = vpack.c.b16 %v154, %v152
  %v203 = vpack.c.b16 %v157, %v155
  %v204 = vpack.c.b16 %v158, %v156
  %v205 = vpack.c.b16 %v161, %v159
  %v206 = vpack.c.b16 %v162, %v160
  %v207 = vpack.c.b16 %v165, %v163
  %v208 = vpack.c.b16 %v166, %v164
  %v209 = vpack.c.b16 %v169, %v167
  %v210 = vpack.c.b16 %v170, %v168
  %v211 = vpack.c.b16 %v173, %v171
  %v212 = vpack.c.b16 %v174, %v172
  %v213 = vpack.c.b16 %v177, %v175
  %v214 = vpack.c.b16 %v178, %v176
  %v215 = vpack.c.b16 %v181, %v179
  %v216 = vpack.c.b16 %v182, %v180
  %v217 = vpack.c.b16 %v185, %v183
  %v218 = vpack.c.b16 %v186, %v184
  %v219 = vpack.c.b16 %v189, %v187
  %v220 = vpack.c.b16 %v190, %v188
  %v221 = vpack.c.b16 %v193, %v191
  %v222 = vpack.c.b16 %v194, %v192
  %v223 = vpack.c.b16 %v195, %v195
  %v224 = vpack.c.b16 %v196, %v196
  %vm251 = vcmask 719872
  %v252 = vsel %vm251, %v56, 0
  %v254 = vsel %vm251, %v88, 0
  %vm256 = vcmask 1043456
  %v258 = vsel %vm256, %v223, 0
  %v261 = vsel %vm256, %v224, 0
  %263 = vmatprep.subr.bf16.mxu0 %v212
  %264 = vmatpush1.bf16.msra.mxu0 %v211
  %265 = vmatprep.subr.bf16.mxu0 %v210
  %266 = vmatpush1.bf16.msra.mxu0 %v209
  %267 = vmatprep.subr.bf16.mxu0 %v208
  %268 = vmatpush1.bf16.msra.mxu0 %v207
  %269 = vmatprep.subr.bf16.mxu0 %v206
  %270 = vmatpush1.bf16.msra.mxu0 %v205
  %271 = vmatprep.subr.bf16.mxu0 %v204
  %272 = vmatpush1.bf16.msra.mxu0 %v203
  %273 = vmatprep.subr.bf16.mxu0 %v202
  %274 = vmatpush1.bf16.msra.mxu0 %v201
  %275 = vmatprep.subr.bf16.mxu0 %v200
  %276 = vmatpush1.bf16.msra.mxu0 %v199
  %277 = vmatprep.subr.bf16.mxu0 %v198
  %278 = vmatpush1.bf16.msra.mxu0 %v197
  %279 = vmatprep.subr.bf16.mxu0 0
  %280 = vmatpush2.bf16.msra.mxu0 0
  %281 = vmatprep.subr.bf16.mxu0 0
  %282 = vmatpush2.bf16.msra.mxu0 0
  %283 = vmatprep.subr.bf16.mxu0 %v261
  %284 = vmatpush2.bf16.msra.mxu0 %v258
  %285 = vmatprep.subr.bf16.mxu0 %v222
  %286 = vmatpush2.bf16.msra.mxu0 %v221
  %287 = vmatprep.subr.bf16.mxu0 %v220
  %288 = vmatpush2.bf16.msra.mxu0 %v219
  %289 = vmatprep.subr.bf16.mxu0 %v218
  %290 = vmatpush2.bf16.msra.mxu0 %v217
  %291 = vmatprep.subr.bf16.mxu0 %v216
  %292 = vmatpush2.bf16.msra.mxu0 %v215
  %293 = vmatprep.subr.bf16.mxu0 %v214
  %294 = vmatpush2.bf16.msra.mxu0 %v213
  %295 = vmatprep.mubr.bf16.mxu0 %v252
  %296 = vmatmul.mubr.bf16.gmra.mxu0 %v52
  %v297 = vpop.f32.mrf.mxu0
  %v298 = vadd.f32 0.0, %v297
  %v299 = vpop.f32.mrf.mxu0
  %v300 = vadd.f32 0.0, %v299
  %v301 = vpop.f32.mrf.mxu0
  %v302 = vadd.f32 0.0, %v301
  %v303 = vpop.f32.mrf.mxu0
  %v304 = vadd.f32 0.0, %v303
  %305 = vmatprep.mubr.bf16.mxu0 %v254
  %306 = vmatmul.mubr.bf16.gmra.mxu0 %v85
  %v307 = vpop.f32.mrf.mxu0
  %v308 = vadd.f32 0.0, %v307
  %v309 = vpop.f32.mrf.mxu0
  %v310 = vadd.f32 0.0, %v309
  %v311 = vpop.f32.mrf.mxu0
  %v312 = vadd.f32 0.0, %v311
  %v313 = vpop.f32.mrf.mxu0
  %v314 = vadd.f32 0.0, %v313
  %315 = vdwg.mxu0
  %v316 = vpack.c.bf16 %v302, %v298
  %v317 = vpack.c.bf16 %v304, %v300
  %v318 = vpack.c.bf16 %v312, %v308
  %v319 = vpack.c.bf16 %v314, %v310
  %v324 = vunpack.c.l.b16 %v316
  %v325 = vunpack.c.l.b16 %v317
  %v326 = vunpack.c.h.b16 %v316
  %v327 = vunpack.c.h.b16 %v317
  %v328 = vunpack.c.l.b16 %v318
  %v329 = vunpack.c.l.b16 %v319
  %v330 = vunpack.c.h.b16 %v318
  %v331 = vunpack.c.h.b16 %v319
  %v332 = vpack.c.b16 %v325, %v324
  %v333 = vpack.c.b16 %v327, %v326
  %v334 = vpack.c.b16 %v329, %v328
  %v335 = vpack.c.b16 %v331, %v330
  %vm340 = vcmask 130052
  %vm341 = vmor %vm340, %vm256
  %342 = vst.msk [vmem:[%s2] sm:$0xff] %vm341, %v332
  %343 = vst.msk [vmem:[%s2 + $0x8] sm:$0xff] %vm341, %v333
  %344 = vst.msk [vmem:[%s2 + $0x10] sm:$0xff] %vm341, %v334
  %345 = vst.msk [vmem:[%s2 + $0x18] sm:$0xff] %vm341, %v335
  %v346 = vadd.f32 %v298, %v302
  %v347 = vadd.f32 %v346, %v308
  %v348 = vadd.f32 %v347, %v312
  %v349 = vrot.slane %v348, 4
  %v350 = vadd.f32 %v348, %v349
  %v351 = vrot.slane %v350, 2
  %v352 = vadd.f32 %v350, %v351
  %v353 = vrot.slane %v352, 1
  %v354 = vadd.f32 %v352, %v353
  %v355 = vsel %vm54, %v300, 0.0
  %v356 = vsel %vm54, %v304, 0.0
  %v357 = vadd.f32 %v355, %v356
  %v358 = vsel %vm54, %v310, 0.0
  %v359 = vadd.f32 %v357, %v358
  %v360 = vsel %vm54, %v314, 0.0
  %v361 = vadd.f32 %v359, %v360
  %v362 = vrot.slane %v361, 4
  %v363 = vadd.f32 %v361, %v362
  %v364 = vrot.slane %v363, 2
  %v365 = vadd.f32 %v363, %v364
  %v366 = vrot.slane %v365, 1
  %v367 = vadd.f32 %v365, %v366
  %v370 = vcombine.low %v354, %v367
  %v372 = vunpack.c.l.s4 1966171168
  %v373 = vunpack.c.0.s8 %v372
  %v374 = vlaneseq
  %v375 = vshrl.u32 %v374, 7
  %v376 = vsub.s32 %v373, %v375
  %v377 = vrot.slane %v370, %v376
  %v379 = vunpack.c.l.s4 1966171168
  %v380 = vunpack.c.0.s8 %v379
  %v381 = vlaneseq
  %v382 = vshrl.u32 %v381, 7
  %v383 = vsub.s32 %v380, %v382
  %v384 = vrot.slane %v377, %v383
  %v386 = vlaneseq
  %vm387 = vcmp.ge.s32.totalorder %v386, 0
  %vm388 = vcmp.lt.s32.totalorder %v386, 144
  %vm389 = vmand %vm387, %vm388
  %390 = vst.msk [vmem:[%s3] sm:$0x3] %vm389, %v384
  %v391 = vmul.f32 %v298, %v298
  %v392 = vmul.f32 %v300, %v300
  %v393 = vmul.f32 %v302, %v302
  %v394 = vmul.f32 %v304, %v304
  %v395 = vmul.f32 %v308, %v308
  %v396 = vmul.f32 %v310, %v310
  %v397 = vmul.f32 %v312, %v312
  %v398 = vmul.f32 %v314, %v314
  %v399 = vadd.f32 %v391, %v393
  %v400 = vadd.f32 %v399, %v395
  %v401 = vadd.f32 %v400, %v397
  %v402 = vrot.slane %v401, 4
  %v403 = vadd.f32 %v401, %v402
  %v404 = vrot.slane %v403, 2
  %v405 = vadd.f32 %v403, %v404
  %v406 = vrot.slane %v405, 1
  %v407 = vadd.f32 %v405, %v406
  %v408 = vsel %vm54, %v392, 0.0
  %v409 = vsel %vm54, %v394, 0.0
  %v410 = vadd.f32 %v408, %v409
  %v411 = vsel %vm54, %v396, 0.0
  %v412 = vadd.f32 %v410, %v411
  %v413 = vsel %vm54, %v398, 0.0
  %v414 = vadd.f32 %v412, %v413
  %v415 = vrot.slane %v414, 4
  %v416 = vadd.f32 %v414, %v415
  %v417 = vrot.slane %v416, 2
  %v418 = vadd.f32 %v416, %v417
  %v419 = vrot.slane %v418, 1
  %v420 = vadd.f32 %v418, %v419
  %v423 = vcombine.low %v407, %v420
  %v425 = vunpack.c.l.s4 1966171168
  %v426 = vunpack.c.0.s8 %v425
  %v427 = vlaneseq
  %v428 = vshrl.u32 %v427, 7
  %v429 = vsub.s32 %v426, %v428
  %v430 = vrot.slane %v423, %v429
  %v432 = vunpack.c.l.s4 1966171168
  %v433 = vunpack.c.0.s8 %v432
  %v434 = vlaneseq
  %v435 = vshrl.u32 %v434, 7
  %v436 = vsub.s32 %v433, %v435
  %v437 = vrot.slane %v430, %v436
  %439 = vst.msk [vmem:[%s4] sm:$0x3] %vm389, %v437
  // Predicated region
  $region10: #{double_conv.3} parent=0 // pred_check
    _
  $region11: #{double_conv.3} parent=0 // pred_check_branch
    %441 = sbr.rel (0) target = $region13
  $region12: #{double_conv.3} parent=0 // pred_region
    _
  $region13: #{double_conv.3} parent=0 // pred_fallthru
    _
  // Predicated region
  $region14: #{double_conv.3} parent=0 // pred_check
    _
  $region15: #{double_conv.3} parent=0 // pred_check_branch
    %443 = sbr.rel (0) target = $region17
  $region16: #{double_conv.3} parent=0 // pred_region
    _
  $region17: #{double_conv.3} parent=0 // pred_fallthru
    _
  // Predicated region
  $region18: #{double_conv.3} parent=0 // pred_check
    _
  $region19: #{double_conv.3} parent=0 // pred_check_branch
    %445 = sbr.rel (0) target = $region21
  $region20: #{double_conv.3} parent=0 // pred_region
    _
  $region21: #{double_conv.3} parent=0 // pred_fallthru
    _
  // Predicated region
  $region22: #{double_conv.3} parent=0 // pred_check
    _
  $region23: #{double_conv.3} parent=0 // pred_check_branch
    %447 = sbr.rel (0) target = $region25
  $region24: #{double_conv.3} parent=0 // pred_region
    _
  $region25: #{double_conv.3} parent=0 // pred_fallthru
    _
  // Predicated region
  $region26: #{double_conv.3} parent=0 // pred_check
    _
  $region27: #{double_conv.3} parent=0 // pred_check_branch
    %449 = sbr.rel (0) target = $region29
  $region28: #{double_conv.3} parent=0 // pred_region
    _
  $region29: #{double_conv.3} parent=0 // pred_fallthru
    _
  // Predicated region
  $region30: #{double_conv.3} parent=0 // pred_check
    _
  $region31: #{double_conv.3} parent=0 // pred_check_branch
    %451 = sbr.rel (0) target = $region33
  $region32: #{double_conv.3} parent=0 // pred_region
    _
  $region33: #{double_conv.3} parent=0 // pred_fallthru
    _

// kernel: double_conv.5
$region0: #{double_conv.5}
  #allocation0 [shape = 'u32[]', space=smem, size = 0x4, offset = 0x4, fixed_abs, tag = 'smem constant byte address 0x4 - core index']
  #allocation1 [shape = 'u32[144,128]{1,0:T(1,128)}', space=vmem, size = 0x12000, scoped, tag = 'internal scratch']
  %s0 = inlined_call_operand.vmem [shape: bf16[2,16,128], index: 0, kind: input, shape index: {}]
  %s1 = inlined_call_operand.vmem [shape: f32[1,128], index: 1, kind: input, shape index: {}]
  %s2 = inlined_call_operand.vmem [shape: f32[1,128], index: 2, kind: input, shape index: {}]
  %s3 = inlined_call_operand.vmem [shape: f32[2,16,128], index: 3, kind: output, shape index: {}]
  %s4 = sld [smem:[#allocation0]]
  $region22: #{double_conv.5} parent=0
    _
  %s6 = ssub.s32 1, %s4
  %s7 = scalar_select 0, %s6, %s4
  // Predicated region
  $region2: #{double_conv.5} parent=0 // pred_check
    _
  $region3: #{double_conv.5} parent=0 // pred_check_branch
    %9 = sbr.rel (0) target = $region5
  $region4: #{double_conv.5} parent=0 // pred_region
    _
  $region5: #{double_conv.5} parent=0 // pred_fallthru
    _
  // Predicated region
  $region6: #{double_conv.5} parent=0 // pred_check
    _
  $region7: #{double_conv.5} parent=0 // pred_check_branch
    %11 = sbr.rel (0) target = $region9
  $region8: #{double_conv.5} parent=0 // pred_region
    _
  $region9: #{double_conv.5} parent=0 // pred_fallthru
    _
  // Predicated region
  $region10: #{double_conv.5} parent=0 // pred_check
    _
  $region11: #{double_conv.5} parent=0 // pred_check_branch
    %13 = sbr.rel (0) target = $region13
  $region12: #{double_conv.5} parent=0 // pred_region
    _
  $region13: #{double_conv.5} parent=0 // pred_fallthru
    _
  %v14 = vld [vmem:[%s0] sm:$0xf]
  %v15 = vld [vmem:[%s0 + $0x4] sm:$0xf]
  %v16 = vld [vmem:[%s0 + $0x8] sm:$0xf]
  %v17 = vld [vmem:[%s0 + $0xc] sm:$0xf]
  %v18 = vunpack.c.l.bf16 %v14
  %v19 = vunpack.c.l.bf16 %v15
  %v20 = vunpack.c.l.bf16 %v16
  %v21 = vunpack.c.l.bf16 %v17
  %v22 = vld [vmem:[%s1] sm:$0x1]
  %v24 = vlaneseq
  %v25 = vshrl.u32 %v24, 7
  %v26 = vsub.s32 0, %v25
  %v27 = vrot.slane %v22, %v26
  %v29 = vmul.f32 %v18, %v27
  %v30 = vmul.f32 %v19, %v27
  %v31 = vmul.f32 %v20, %v27
  %v32 = vmul.f32 %v21, %v27
  %v33 = vld [vmem:[%s2] sm:$0x1]
  %v35 = vlaneseq
  %v36 = vshrl.u32 %v35, 7
  %v37 = vsub.s32 0, %v36
  %v38 = vrot.slane %v33, %v37
  %v40 = vadd.f32 %v29, %v38
  %v41 = vadd.f32 %v30, %v38
  %v42 = vadd.f32 %v31, %v38
  %v43 = vadd.f32 %v32, %v38
  %v44 = vmax.f32 %v40, 0.0
  %v45 = vmax.f32 %v41, 0.0
  %v46 = vmax.f32 %v42, 0.0
  %v47 = vmax.f32 %v43, 0.0
  %48 = vst [vmem:[%s3] sm:$0xff] %v44
  %49 = vst [vmem:[%s3 + $0x8] sm:$0xff] %v45
  %50 = vst [vmem:[%s3 + $0x10] sm:$0xff] %v46
  %51 = vst [vmem:[%s3 + $0x18] sm:$0xff] %v47
  // Predicated region
  $region14: #{double_conv.5} parent=0 // pred_check
    _
  $region15: #{double_conv.5} parent=0 // pred_check_branch
    %53 = sbr.rel (0) target = $region17
  $region16: #{double_conv.5} parent=0 // pred_region
    _
  $region17: #{double_conv.5} parent=0 // pred_fallthru
    _
  // Predicated region
  $region18: #{double_conv.5} parent=0 // pred_check
    _
  $region19: #{double_conv.5} parent=0 // pred_check_branch
    %55 = sbr.rel (0) target = $region21
  $region20: #{double_conv.5} parent=0 // pred_region
    _
  $region21: #{double_conv.5} parent=0 // pred_fallthru
    _

// kernel: double_conv.4
$region0: #{double_conv.4}
  #allocation0 [shape = 'u32[]', space=smem, size = 0x4, offset = 0x4, fixed_abs, tag = 'smem constant byte address 0x4 - core index']
  #allocation1 [shape = 'u32[144,128]{1,0:T(1,128)}', space=vmem, size = 0x12000, scoped, tag = 'internal scratch']
  %s0 = inlined_call_operand.vmem [shape: bf16[2,16,144], index: 0, kind: input, shape index: {}]
  %s1 = inlined_call_operand.vmem [shape: f32[1,144], index: 1, kind: input, shape index: {}]
  %s2 = inlined_call_operand.vmem [shape: f32[1,144], index: 2, kind: input, shape index: {}]
  %s3 = inlined_call_operand.vmem [shape: bf16[432,144], index: 3, kind: input, shape index: {}]
  %s4 = inlined_call_operand.vmem [shape: bf16[2,16,128], index: 4, kind: output, shape index: {0}]
  %s5 = inlined_call_operand.vmem [shape: f32[1,1,128], index: 5, kind: output, shape index: {1}]
  %s6 = inlined_call_operand.vmem [shape: f32[1,1,128], index: 6, kind: output, shape index: {2}]
  %7 = xla_tuple %s4, %s5, %s6
  %s8 = sld [smem:[#allocation0]]
  $region42: #{double_conv.4} parent=0
    _
  %s10 = ssub.s32 1, %s8
  %s11 = scalar_select 0, %s10, %s8
  // Predicated region
  $region2: #{double_conv.4} parent=0 // pred_check
    _
  $region3: #{double_conv.4} parent=0 // pred_check_branch
    %13 = sbr.rel (0) target = $region5
  $region4: #{double_conv.4} parent=0 // pred_region
    _
  $region5: #{double_conv.4} parent=0 // pred_fallthru
    _
  // Predicated region
  $region6: #{double_conv.4} parent=0 // pred_check
    _
  $region7: #{double_conv.4} parent=0 // pred_check_branch
    %15 = sbr.rel (0) target = $region9
  $region8: #{double_conv.4} parent=0 // pred_region
    _
  $region9: #{double_conv.4} parent=0 // pred_fallthru
    _
  // Predicated region
  $region10: #{double_conv.4} parent=0 // pred_check
    _
  $region11: #{double_conv.4} parent=0 // pred_check_branch
    %17 = sbr.rel (0) target = $region13
  $region12: #{double_conv.4} parent=0 // pred_region
    _
  $region13: #{double_conv.4} parent=0 // pred_fallthru
    _
  // Predicated region
  $region14: #{double_conv.4} parent=0 // pred_check
    _
  $region15: #{double_conv.4} parent=0 // pred_check_branch
    %19 = sbr.rel (0) target = $region17
  $region16: #{double_conv.4} parent=0 // pred_region
    _
  $region17: #{double_conv.4} parent=0 // pred_fallthru
    _
  %v21 = vld [vmem:[%s0] sm:$0xff]
  %v22 = vld [vmem:[%s0 + $0x8] sm:$0xff]
  %v23 = vld [vmem:[%s0 + $0x10] sm:$0xff]
  %v24 = vld [vmem:[%s0 + $0x18] sm:$0xff]
  %v25 = vunpack.c.l.bf16 %v21
  %v26 = vunpack.c.h.bf16 %v21
  %v27 = vunpack.c.l.bf16 %v22
  %v28 = vunpack.c.h.bf16 %v22
  %v29 = vunpack.c.l.bf16 %v23
  %v30 = vunpack.c.h.bf16 %v23
  %v31 = vunpack.c.l.bf16 %v24
  %v32 = vunpack.c.h.bf16 %v24
  %v33 = vld [vmem:[%s1] sm:$0x3]
  %v35 = vlaneseq
  %v36 = vshrl.u32 %v35, 7
  %v37 = vsub.s32 0, %v36
  %v38 = vrot.slane %v33, %v37
  %v39 = vlaneseq
  %v40 = vshrl.u32 %v39, 7
  %v41 = vsub.s32 1, %v40
  %v42 = vrot.slane %v33, %v41
  %v45 = vmul.f32 %v25, %v38
  %v46 = vmul.f32 %v26, %v42
  %v47 = vmul.f32 %v27, %v38
  %v48 = vmul.f32 %v28, %v42
  %v49 = vmul.f32 %v29, %v38
  %v50 = vmul.f32 %v30, %v42
  %v51 = vmul.f32 %v31, %v38
  %v52 = vmul.f32 %v32, %v42
  %v53 = vld [vmem:[%s2] sm:$0x3]
  %v55 = vlaneseq
  %v56 = vshrl.u32 %v55, 7
  %v57 = vsub.s32 0, %v56
  %v58 = vrot.slane %v53, %v57
  %v59 = vlaneseq
  %v60 = vshrl.u32 %v59, 7
  %v61 = vsub.s32 1, %v60
  %v62 = vrot.slane %v53, %v61
  %v65 = vadd.f32 %v45, %v58
  %v66 = vadd.f32 %v46, %v62
  %v67 = vadd.f32 %v47, %v58
  %v68 = vadd.f32 %v48, %v62
  %v69 = vadd.f32 %v49, %v58
  %v70 = vadd.f32 %v50, %v62
  %v71 = vadd.f32 %v51, %v58
  %v72 = vadd.f32 %v52, %v62
  %v73 = vmax.f32 %v65, 0.0
  %v74 = vmax.f32 %v66, 0.0
  %v75 = vmax.f32 %v67, 0.0
  %v76 = vmax.f32 %v68, 0.0
  %v77 = vmax.f32 %v69, 0.0
  %v78 = vmax.f32 %v70, 0.0
  %v79 = vmax.f32 %v71, 0.0
  %v80 = vmax.f32 %v72, 0.0
  %v81 = vpack.c.bf16 %v75, %v73
  %v82 = vpack.c.bf16 %v76, %v74
  %v83 = vpack.c.bf16 %v79, %v77
  %v84 = vpack.c.bf16 %v80, %v78
  %v86 = vshrl.u32 %v81, 16
  %v88 = vrot.slane %v86, 7
  %v89 = vshll.u32 %v81, 16
  %v91 = vor.u32 %v88, %v89
  %v93 = vshrl.u32 %v82, 16
  %v95 = vrot.slane %v93, 7
  %v96 = vshll.u32 %v82, 16
  %v98 = vor.u32 %v95, %v96
  %vm101 = vcmask 1040384
  %vm102 = vsmask.f32 256
  %vm103 = vmand %vm101, %vm102
  %v104 = vsel %vm103, 0, %v91
  %v105 = vsel %vm103, 0, %v98
  %v106 = vrot.slane %v89, 1
  %v107 = vor.u32 %v86, %v106
  %v108 = vrot.slane %v96, 1
  %v109 = vor.u32 %v93, %v108
  %vm112 = vcmask 1047552
  %vm113 = vsmask.f32 7424
  %vm114 = vmand %vm112, %vm113
  %v115 = vsel %vm114, %v107, 0
  %v116 = vsel %vm114, %v109, 0
  %119 = vrot.lane.b32.xlu0 %v81, 16
  %v120 = vpop.permute.xlu0 %119
  %121 = vrot.lane.b32.xlu0 %v82, 16
  %v122 = vpop.permute.xlu0 %121
  %vm123 = vcmask 130048
  %v124 = vsel %vm123, %v120, %v122
  %127 = vrot.lane.b32.xlu0 %v115, 32
  %v128 = vpop.permute.xlu0 %127
  %129 = vrot.lane.b32.xlu0 %v116, 32
  %v130 = vpop.permute.xlu0 %129
  %vm131 = vcmask 261120
  %v132 = vsel %vm131, %v128, %v130
  %vm133 = vcmask 130048
  %v136 = vsel %vm133, %v105, %v120
  %vm138 = vcmask 261120
  %v141 = vsel %vm138, %v124, %v128
  %v144 = vshrl.u32 %v83, 16
  %v146 = vrot.slane %v144, 7
  %v147 = vshll.u32 %v83, 16
  %v149 = vor.u32 %v146, %v147
  %v151 = vshrl.u32 %v84, 16
  %v153 = vrot.slane %v151, 7
  %v154 = vshll.u32 %v84, 16
  %v156 = vor.u32 %v153, %v154
  %v159 = vsel %vm103, 0, %v149
  %v160 = vsel %vm103, 0, %v156
  %v161 = vrot.slane %v147, 1
  %v162 = vor.u32 %v144, %v161
  %v163 = vrot.slane %v154, 1
  %v164 = vor.u32 %v151, %v163
  %v167 = vsel %vm114, %v162, 0
  %v168 = vsel %vm114, %v164, 0
  %171 = vrot.lane.b32.xlu0 %v83, 16
  %v172 = vpop.permute.xlu0 %171
  %173 = vrot.lane.b32.xlu0 %v84, 16
  %v174 = vpop.permute.xlu0 %173
  %v175 = vsel %vm123, %v172, %v174
  %178 = vrot.lane.b32.xlu0 %v167, 32
  %v179 = vpop.permute.xlu0 %178
  %180 = vrot.lane.b32.xlu0 %v168, 32
  %v181 = vpop.permute.xlu0 %180
  %v182 = vsel %vm131, %v179, %v181
  %v185 = vsel %vm133, %v160, %v172
  %v189 = vsel %vm138, %v175, %v179
  %v191 = vld [vmem:[%s3] sm:$0xff]
  %v192 = vld [vmem:[%s3 + $0x8] sm:$0xff]
  %v193 = vld [vmem:[%s3 + $0x10] sm:$0xff]
  %v194 = vld [vmem:[%s3 + $0x18] sm:$0xff]
  %v195 = vld [vmem:[%s3 + $0x20] sm:$0xff]
  %v196 = vld [vmem:[%s3 + $0x28] sm:$0xff]
  %v197 = vld [vmem:[%s3 + $0x30] sm:$0xff]
  %v198 = vld [vmem:[%s3 + $0x38] sm:$0xff]
  %v199 = vld [vmem:[%s3 + $0x40] sm:$0xff]
  %v200 = vld [vmem:[%s3 + $0x48] sm:$0xff]
  %v201 = vld [vmem:[%s3 + $0x50] sm:$0xff]
  %v202 = vld [vmem:[%s3 + $0x58] sm:$0xff]
  %v203 = vld [vmem:[%s3 + $0x60] sm:$0xff]
  %v204 = vld [vmem:[%s3 + $0x68] sm:$0xff]
  %v205 = vld [vmem:[%s3 + $0x70] sm:$0xff]
  %v206 = vld [vmem:[%s3 + $0x78] sm:$0xff]
  %v207 = vld [vmem:[%s3 + $0x80] sm:$0xff]
  %v208 = vld [vmem:[%s3 + $0x88] sm:$0xff]
  %v209 = vld [vmem:[%s3 + $0x90] sm:$0xff]
  %v210 = vld [vmem:[%s3 + $0x98] sm:$0xff]
  %v211 = vld [vmem:[%s3 + $0xa0] sm:$0xff]
  %v212 = vld [vmem:[%s3 + $0xa8] sm:$0xff]
  %v213 = vld [vmem:[%s3 + $0xb0] sm:$0xff]
  %v214 = vld [vmem:[%s3 + $0xb8] sm:$0xff]
  %v215 = vld [vmem:[%s3 + $0xc0] sm:$0xff]
  %v216 = vld [vmem:[%s3 + $0xc8] sm:$0xff]
  %v217 = vld [vmem:[%s3 + $0xd0] sm:$0xff]
  %v218 = vld [vmem:[%s3 + $0xd8] sm:$0xff]
  %v219 = vld [vmem:[%s3 + $0xe0] sm:$0xff]
  %v220 = vld [vmem:[%s3 + $0xe8] sm:$0xff]
  %v221 = vld [vmem:[%s3 + $0xf0] sm:$0xff]
  %v222 = vld [vmem:[%s3 + $0xf8] sm:$0xff]
  %v223 = vld [vmem:[%s3 + $0x100] sm:$0xff]
  %v224 = vld [vmem:[%s3 + $0x108] sm:$0xff]
  %v225 = vld [vmem:[%s3 + $0x110] sm:$0xff]
  %v226 = vld [vmem:[%s3 + $0x118] sm:$0xff]
  %v227 = vld [vmem:[%s3 + $0x120] sm:$0xff]
  %v228 = vld [vmem:[%s3 + $0x128] sm:$0xff]
  %v229 = vld [vmem:[%s3 + $0x130] sm:$0xff]
  %v230 = vld [vmem:[%s3 + $0x138] sm:$0xff]
  %v231 = vld [vmem:[%s3 + $0x140] sm:$0xff]
  %v232 = vld [vmem:[%s3 + $0x148] sm:$0xff]
  %v233 = vld [vmem:[%s3 + $0x150] sm:$0xff]
  %v234 = vld [vmem:[%s3 + $0x158] sm:$0xff]
  %v235 = vld [vmem:[%s3 + $0x160] sm:$0xff]
  %v236 = vld [vmem:[%s3 + $0x168] sm:$0xff]
  %v237 = vld [vmem:[%s3 + $0x170] sm:$0xff]
  %v238 = vld [vmem:[%s3 + $0x178] sm:$0xff]
  %v239 = vld [vmem:[%s3 + $0x180] sm:$0xff]
  %v240 = vld [vmem:[%s3 + $0x188] sm:$0xff]
  %v241 = vld [vmem:[%s3 + $0x190] sm:$0xff]
  %v242 = vld [vmem:[%s3 + $0x198] sm:$0xff]
  %v243 = vld [vmem:[%s3 + $0x1a0] sm:$0xff]
  %v244 = vld [vmem:[%s3 + $0x1a8] sm:$0xff]
  %v299 = vunpack.c.l.b16 %v191
  %v300 = vunpack.c.h.b16 %v191
  %v301 = vunpack.c.l.b16 %v192
  %v302 = vunpack.c.h.b16 %v192
  %v303 = vunpack.c.l.b16 %v193
  %v304 = vunpack.c.h.b16 %v193
  %v305 = vunpack.c.l.b16 %v194
  %v306 = vunpack.c.h.b16 %v194
  %v307 = vunpack.c.l.b16 %v195
  %v308 = vunpack.c.h.b16 %v195
  %v309 = vunpack.c.l.b16 %v196
  %v310 = vunpack.c.h.b16 %v196
  %v311 = vunpack.c.l.b16 %v197
  %v312 = vunpack.c.h.b16 %v197
  %v313 = vunpack.c.l.b16 %v198
  %v314 = vunpack.c.h.b16 %v198
  %v315 = vunpack.c.l.b16 %v199
  %v316 = vunpack.c.h.b16 %v199
  %v317 = vunpack.c.l.b16 %v200
  %v318 = vunpack.c.h.b16 %v200
  %v319 = vunpack.c.l.b16 %v201
  %v320 = vunpack.c.h.b16 %v201
  %v321 = vunpack.c.l.b16 %v202
  %v322 = vunpack.c.h.b16 %v202
  %v323 = vunpack.c.l.b16 %v203
  %v324 = vunpack.c.h.b16 %v203
  %v325 = vunpack.c.l.b16 %v204
  %v326 = vunpack.c.h.b16 %v204
  %v327 = vunpack.c.l.b16 %v205
  %v328 = vunpack.c.h.b16 %v205
  %v329 = vunpack.c.l.b16 %v206
  %v330 = vunpack.c.h.b16 %v206
  %v331 = vunpack.c.l.b16 %v207
  %v332 = vunpack.c.h.b16 %v207
  %v333 = vunpack.c.l.b16 %v208
  %v334 = vunpack.c.h.b16 %v208
  %v335 = vunpack.c.l.b16 %v209
  %v336 = vunpack.c.h.b16 %v209
  %v337 = vunpack.c.l.b16 %v210
  %v338 = vunpack.c.h.b16 %v210
  %v339 = vunpack.c.l.b16 %v211
  %v340 = vunpack.c.h.b16 %v211
  %v341 = vunpack.c.l.b16 %v212
  %v342 = vunpack.c.h.b16 %v212
  %v343 = vunpack.c.l.b16 %v213
  %v344 = vunpack.c.h.b16 %v213
  %v345 = vunpack.c.l.b16 %v214
  %v346 = vunpack.c.h.b16 %v214
  %v347 = vunpack.c.l.b16 %v215
  %v348 = vunpack.c.h.b16 %v215
  %v349 = vunpack.c.l.b16 %v216
  %v350 = vunpack.c.h.b16 %v216
  %v351 = vunpack.c.l.b16 %v217
  %v352 = vunpack.c.h.b16 %v217
  %v353 = vunpack.c.l.b16 %v218
  %v354 = vunpack.c.h.b16 %v218
  %v355 = vunpack.c.l.b16 %v219
  %v356 = vunpack.c.h.b16 %v219
  %v357 = vunpack.c.l.b16 %v220
  %v358 = vunpack.c.h.b16 %v220
  %v359 = vunpack.c.l.b16 %v221
  %v360 = vunpack.c.h.b16 %v221
  %v361 = vunpack.c.l.b16 %v222
  %v362 = vunpack.c.h.b16 %v222
  %v363 = vunpack.c.l.b16 %v223
  %v364 = vunpack.c.h.b16 %v223
  %v365 = vunpack.c.l.b16 %v224
  %v366 = vunpack.c.h.b16 %v224
  %v367 = vunpack.c.l.b16 %v225
  %v368 = vunpack.c.h.b16 %v225
  %v369 = vunpack.c.l.b16 %v226
  %v370 = vunpack.c.h.b16 %v226
  %v371 = vunpack.c.l.b16 %v227
  %v372 = vunpack.c.h.b16 %v227
  %v373 = vunpack.c.l.b16 %v228
  %v374 = vunpack.c.h.b16 %v228
  %v375 = vunpack.c.l.b16 %v229
  %v376 = vunpack.c.h.b16 %v229
  %v377 = vunpack.c.l.b16 %v230
  %v378 = vunpack.c.h.b16 %v230
  %v379 = vunpack.c.l.b16 %v231
  %v380 = vunpack.c.h.b16 %v231
  %v381 = vunpack.c.l.b16 %v232
  %v382 = vunpack.c.h.b16 %v232
  %v383 = vunpack.c.l.b16 %v233
  %v384 = vunpack.c.h.b16 %v233
  %v385 = vunpack.c.l.b16 %v234
  %v386 = vunpack.c.h.b16 %v234
  %v387 = vunpack.c.l.b16 %v235
  %v388 = vunpack.c.h.b16 %v235
  %v389 = vunpack.c.l.b16 %v236
  %v390 = vunpack.c.h.b16 %v236
  %v391 = vunpack.c.l.b16 %v237
  %v392 = vunpack.c.h.b16 %v237
  %v393 = vunpack.c.l.b16 %v238
  %v394 = vunpack.c.h.b16 %v238
  %v395 = vunpack.c.l.b16 %v239
  %v396 = vunpack.c.h.b16 %v239
  %v397 = vunpack.c.l.b16 %v240
  %v398 = vunpack.c.h.b16 %v240
  %v399 = vunpack.c.l.b16 %v241
  %v400 = vunpack.c.h.b16 %v241
  %v401 = vunpack.c.l.b16 %v242
  %v402 = vunpack.c.h.b16 %v242
  %v403 = vunpack.c.l.b16 %v243
  %v404 = vunpack.c.h.b16 %v243
  %v405 = vunpack.c.l.b16 %v244
  %v406 = vunpack.c.h.b16 %v244
  %v407 = vpack.c.b16 %v301, %v299
  %v408 = vpack.c.b16 %v302, %v300
  %v409 = vpack.c.b16 %v305, %v303
  %v410 = vpack.c.b16 %v306, %v304
  %v411 = vpack.c.b16 %v309, %v307
  %v412 = vpack.c.b16 %v310, %v308
  %v413 = vpack.c.b16 %v313, %v311
  %v414 = vpack.c.b16 %v314, %v312
  %v415 = vpack.c.b16 %v317, %v315
  %v416 = vpack.c.b16 %v318, %v316
  %v417 = vpack.c.b16 %v321, %v319
  %v418 = vpack.c.b16 %v322, %v320
  %v419 = vpack.c.b16 %v325, %v323
  %v420 = vpack.c.b16 %v326, %v324
  %v421 = vpack.c.b16 %v329, %v327
  %v422 = vpack.c.b16 %v330, %v328
  %v423 = vpack.c.b16 %v333, %v331
  %v424 = vpack.c.b16 %v334, %v332
  %v425 = vpack.c.b16 %v337, %v335
  %v426 = vpack.c.b16 %v338, %v336
  %v427 = vpack.c.b16 %v341, %v339
  %v428 = vpack.c.b16 %v342, %v340
  %v429 = vpack.c.b16 %v345, %v343
  %v430 = vpack.c.b16 %v346, %v344
  %v431 = vpack.c.b16 %v349, %v347
  %v432 = vpack.c.b16 %v350, %v348
  %v433 = vpack.c.b16 %v353, %v351
  %v434 = vpack.c.b16 %v354, %v352
  %v435 = vpack.c.b16 %v357, %v355
  %v436 = vpack.c.b16 %v358, %v356
  %v437 = vpack.c.b16 %v361, %v359
  %v438 = vpack.c.b16 %v362, %v360
  %v439 = vpack.c.b16 %v365, %v363
  %v440 = vpack.c.b16 %v366, %v364
  %v441 = vpack.c.b16 %v369, %v367
  %v442 = vpack.c.b16 %v370, %v368
  %v443 = vpack.c.b16 %v373, %v371
  %v444 = vpack.c.b16 %v374, %v372
  %v445 = vpack.c.b16 %v377, %v375
  %v446 = vpack.c.b16 %v378, %v376
  %v447 = vpack.c.b16 %v381, %v379
  %v448 = vpack.c.b16 %v382, %v380
  %v449 = vpack.c.b16 %v385, %v383
  %v450 = vpack.c.b16 %v386, %v384
  %v451 = vpack.c.b16 %v389, %v387
  %v452 = vpack.c.b16 %v390, %v388
  %v453 = vpack.c.b16 %v393, %v391
  %v454 = vpack.c.b16 %v394, %v392
  %v455 = vpack.c.b16 %v397, %v395
  %v456 = vpack.c.b16 %v398, %v396
  %v457 = vpack.c.b16 %v401, %v399
  %v458 = vpack.c.b16 %v402, %v400
  %v459 = vpack.c.b16 %v405, %v403
  %v460 = vpack.c.b16 %v406, %v404
  %vm515 = vcmask 392192
  %v517 = vsel %vm515, %v132, 0
  %v520 = vsel %vm515, %v182, 0
  %522 = vmatprep.subr.bf16.mxu0 %v422
  %523 = vmatpush1.bf16.msra.mxu0 %v421
  %524 = vmatprep.subr.bf16.mxu0 %v420
  %525 = vmatpush1.bf16.msra.mxu0 %v419
  %526 = vmatprep.subr.bf16.mxu0 %v418
  %527 = vmatpush1.bf16.msra.mxu0 %v417
  %528 = vmatprep.subr.bf16.mxu0 %v416
  %529 = vmatpush1.bf16.msra.mxu0 %v415
  %530 = vmatprep.subr.bf16.mxu0 %v414
  %531 = vmatpush1.bf16.msra.mxu0 %v413
  %532 = vmatprep.subr.bf16.mxu0 %v412
  %533 = vmatpush1.bf16.msra.mxu0 %v411
  %534 = vmatprep.subr.bf16.mxu0 %v410
  %535 = vmatpush1.bf16.msra.mxu0 %v409
  %536 = vmatprep.subr.bf16.mxu0 %v408
  %537 = vmatpush1.bf16.msra.mxu0 %v407
  %538 = vmatprep.subr.bf16.mxu0 %v438
  %539 = vmatpush2.bf16.msra.mxu0 %v437
  %540 = vmatprep.subr.bf16.mxu0 %v436
  %541 = vmatpush2.bf16.msra.mxu0 %v435
  %542 = vmatprep.subr.bf16.mxu0 %v434
  %543 = vmatpush2.bf16.msra.mxu0 %v433
  %544 = vmatprep.subr.bf16.mxu0 %v432
  %545 = vmatpush2.bf16.msra.mxu0 %v431
  %546 = vmatprep.subr.bf16.mxu0 %v430
  %547 = vmatpush2.bf16.msra.mxu0 %v429
  %548 = vmatprep.subr.bf16.mxu0 %v428
  %549 = vmatpush2.bf16.msra.mxu0 %v427
  %550 = vmatprep.subr.bf16.mxu0 %v426
  %551 = vmatpush2.bf16.msra.mxu0 %v425
  %552 = vmatprep.subr.bf16.mxu0 %v424
  %553 = vmatpush2.bf16.msra.mxu0 %v423
  %554 = vmatprep.mubr.bf16.mxu0 %v136
  %555 = vmatmul.mubr.bf16.gmra.mxu0 %v104
  %v556 = vpop.f32.mrf.mxu0
  %v557 = vadd.f32 0.0, %v556
  %v558 = vpop.f32.mrf.mxu0
  %v559 = vadd.f32 0.0, %v558
  %v560 = vpop.f32.mrf.mxu0
  %v561 = vadd.f32 0.0, %v560
  %v562 = vpop.f32.mrf.mxu0
  %v563 = vadd.f32 0.0, %v562
  %564 = vmatprep.mubr.bf16.mxu0 %v185
  %565 = vmatmul.mubr.bf16.gmra.mxu0 %v159
  %v566 = vpop.f32.mrf.mxu0
  %v567 = vadd.f32 0.0, %v566
  %v568 = vpop.f32.mrf.mxu0
  %v569 = vadd.f32 0.0, %v568
  %v570 = vpop.f32.mrf.mxu0
  %v571 = vadd.f32 0.0, %v570
  %v572 = vpop.f32.mrf.mxu0
  %v573 = vadd.f32 0.0, %v572
  %574 = vdwg.mxu0
  %575 = vmatprep.subr.bf16.mxu0 %v454
  %576 = vmatpush1.bf16.msra.mxu0 %v453
  %577 = vmatprep.subr.bf16.mxu0 %v452
  %578 = vmatpush1.bf16.msra.mxu0 %v451
  %579 = vmatprep.subr.bf16.mxu0 %v450
  %580 = vmatpush1.bf16.msra.mxu0 %v449
  %581 = vmatprep.subr.bf16.mxu0 %v448
  %582 = vmatpush1.bf16.msra.mxu0 %v447
  %583 = vmatprep.subr.bf16.mxu0 %v446
  %584 = vmatpush1.bf16.msra.mxu0 %v445
  %585 = vmatprep.subr.bf16.mxu0 %v444
  %586 = vmatpush1.bf16.msra.mxu0 %v443
  %587 = vmatprep.subr.bf16.mxu0 %v442
  %588 = vmatpush1.bf16.msra.mxu0 %v441
  %589 = vmatprep.subr.bf16.mxu0 %v440
  %590 = vmatpush1.bf16.msra.mxu0 %v439
  %591 = vmatprep.subr.bf16.mxu0 0
  %592 = vmatpush2.bf16.msra.mxu0 0
  %593 = vmatprep.subr.bf16.mxu0 0
  %594 = vmatpush2.bf16.msra.mxu0 0
  %595 = vmatprep.subr.bf16.mxu0 0
  %596 = vmatpush2.bf16.msra.mxu0 0
  %597 = vmatprep.subr.bf16.mxu0 0
  %598 = vmatpush2.bf16.msra.mxu0 0
  %599 = vmatprep.subr.bf16.mxu0 0
  %600 = vmatpush2.bf16.msra.mxu0 0
  %601 = vmatprep.subr.bf16.mxu0 %v460
  %602 = vmatpush2.bf16.msra.mxu0 %v459
  %603 = vmatprep.subr.bf16.mxu0 %v458
  %604 = vmatpush2.bf16.msra.mxu0 %v457
  %605 = vmatprep.subr.bf16.mxu0 %v456
  %606 = vmatpush2.bf16.msra.mxu0 %v455
  %607 = vmatprep.mubr.bf16.mxu0 %v517
  %608 = vmatmul.mubr.bf16.gmra.mxu0 %v141
  %v609 = vpop.f32.mrf.mxu0
  %v610 = vadd.f32 %v557, %v609
  %v611 = vpop.f32.mrf.mxu0
  %v612 = vadd.f32 %v559, %v611
  %v613 = vpop.f32.mrf.mxu0
  %v614 = vadd.f32 %v561, %v613
  %v615 = vpop.f32.mrf.mxu0
  %v616 = vadd.f32 %v563, %v615
  %617 = vmatprep.mubr.bf16.mxu0 %v520
  %618 = vmatmul.mubr.bf16.gmra.mxu0 %v189
  %v619 = vpop.f32.mrf.mxu0
  %v620 = vadd.f32 %v567, %v619
  %v621 = vpop.f32.mrf.mxu0
  %v622 = vadd.f32 %v569, %v621
  %v623 = vpop.f32.mrf.mxu0
  %v624 = vadd.f32 %v571, %v623
  %v625 = vpop.f32.mrf.mxu0
  %v626 = vadd.f32 %v573, %v625
  %627 = vdwg.mxu0
  %v628 = vpack.c.bf16 %v614, %v610
  %v629 = vpack.c.bf16 %v616, %v612
  %v630 = vpack.c.bf16 %v624, %v620
  %v631 = vpack.c.bf16 %v626, %v622
  %v636 = vunpack.c.l.b16 %v628
  %v637 = vunpack.c.l.b16 %v629
  %v638 = vunpack.c.h.b16 %v628
  %v639 = vunpack.c.h.b16 %v629
  %v640 = vunpack.c.l.b16 %v630
  %v641 = vunpack.c.l.b16 %v631
  %v642 = vunpack.c.h.b16 %v630
  %v643 = vunpack.c.h.b16 %v631
  %v644 = vpack.c.b16 %v637, %v636
  %v645 = vpack.c.b16 %v639, %v638
  %v646 = vpack.c.b16 %v641, %v640
  %v647 = vpack.c.b16 %v643, %v642
  %648 = vrot.lane.b32.xlu0 %v644, 120
  %v649 = vpop.permute.xlu0 %648
  %650 = vrot.lane.b32.xlu0 %v645, 120
  %v651 = vpop.permute.xlu0 %650
  %652 = vrot.lane.b32.xlu0 %v646, 120
  %v653 = vpop.permute.xlu0 %652
  %654 = vrot.lane.b32.xlu0 %v647, 120
  %v655 = vpop.permute.xlu0 %654
  %v656 = vrot.slane %v649, 4
  %v657 = vrot.slane %v651, 4
  %v658 = vrot.slane %v653, 4
  %v659 = vrot.slane %v655, 4
  %vm660 = vcmask 982016
  %v661 = vsel %vm660, %v649, %v656
  %v662 = vsel %vm660, %v651, %v657
  %v663 = vsel %vm660, %v653, %v658
  %v664 = vsel %vm660, %v655, %v659
  %669 = vst [vmem:[%s4] sm:$0xf] %v661
  %670 = vst [vmem:[%s4 + $0x4] sm:$0xf] %v662
  %671 = vst [vmem:[%s4 + $0x8] sm:$0xf] %v663
  %672 = vst [vmem:[%s4 + $0xc] sm:$0xf] %v664
  %vm673 = vcmask 1047616
  %v674 = vsel %vm673, %v610, 0.0
  %v675 = vsel %vm673, %v614, 0.0
  %v676 = vadd.f32 %v674, %v675
  %v677 = vsel %vm673, %v620, 0.0
  %v678 = vadd.f32 %v676, %v677
  %v679 = vsel %vm673, %v624, 0.0
  %v680 = vadd.f32 %v678, %v679
  %v681 = vrot.slane %v680, 4
  %v682 = vadd.f32 %v680, %v681
  %v683 = vrot.slane %v682, 2
  %v684 = vadd.f32 %v682, %v683
  %v685 = vrot.slane %v684, 1
  %v686 = vadd.f32 %v684, %v685
  %vm687 = vcmask 64512
  %v688 = vsel %vm687, %v612, 0.0
  %v689 = vsel %vm687, %v616, 0.0
  %v690 = vadd.f32 %v688, %v689
  %v691 = vsel %vm687, %v622, 0.0
  %v692 = vadd.f32 %v690, %v691
  %v693 = vsel %vm687, %v626, 0.0
  %v694 = vadd.f32 %v692, %v693
  %v695 = vrot.slane %v694, 4
  %v696 = vadd.f32 %v694, %v695
  %v697 = vrot.slane %v696, 2
  %v698 = vadd.f32 %v696, %v697
  %v699 = vrot.slane %v698, 1
  %v700 = vadd.f32 %v698, %v699
  %703 = vrot.lane.b32.xlu0 %v686, 120
  %v704 = vpop.permute.xlu0 %703
  %705 = vrot.lane.b32.xlu0 %v700, 120
  %v706 = vpop.permute.xlu0 %705
  %vm707 = vcmask 982016
  %v708 = vsel %vm707, %v704, %v706
  %710 = vst [vmem:[%s5] sm:$0x1] %v708
  %v711 = vmul.f32 %v610, %v610
  %v712 = vmul.f32 %v612, %v612
  %v713 = vmul.f32 %v614, %v614
  %v714 = vmul.f32 %v616, %v616
  %v715 = vmul.f32 %v620, %v620
  %v716 = vmul.f32 %v622, %v622
  %v717 = vmul.f32 %v624, %v624
  %v718 = vmul.f32 %v626, %v626
  %v719 = vsel %vm673, %v711, 0.0
  %v720 = vsel %vm673, %v713, 0.0
  %v721 = vadd.f32 %v719, %v720
  %v722 = vsel %vm673, %v715, 0.0
  %v723 = vadd.f32 %v721, %v722
  %v724 = vsel %vm673, %v717, 0.0
  %v725 = vadd.f32 %v723, %v724
  %v726 = vrot.slane %v725, 4
  %v727 = vadd.f32 %v725, %v726
  %v728 = vrot.slane %v727, 2
  %v729 = vadd.f32 %v727, %v728
  %v730 = vrot.slane %v729, 1
  %v731 = vadd.f32 %v729, %v730
  %v732 = vsel %vm687, %v712, 0.0
  %v733 = vsel %vm687, %v714, 0.0
  %v734 = vadd.f32 %v732, %v733
  %v735 = vsel %vm687, %v716, 0.0
  %v736 = vadd.f32 %v734, %v735
  %v737 = vsel %vm687, %v718, 0.0
  %v738 = vadd.f32 %v736, %v737
  %v739 = vrot.slane %v738, 4
  %v740 = vadd.f32 %v738, %v739
  %v741 = vrot.slane %v740, 2
  %v742 = vadd.f32 %v740, %v741
  %v743 = vrot.slane %v742, 1
  %v744 = vadd.f32 %v742, %v743
  %747 = vrot.lane.b32.xlu0 %v731, 120
  %v748 = vpop.permute.xlu0 %747
  %749 = vrot.lane.b32.xlu0 %v744, 120
  %v750 = vpop.permute.xlu0 %749
  %v751 = vsel %vm707, %v748, %v750
  %753 = vst [vmem:[%s6] sm:$0x1] %v751
  // Predicated region
  $region18: #{double_conv.4} parent=0 // pred_check
    _
  $region19: #{double_conv.4} parent=0 // pred_check_branch
    %755 = sbr.rel (0) target = $region21
  $region20: #{double_conv.4} parent=0 // pred_region
    _
  $region21: #{double_conv.4} parent=0 // pred_fallthru
    _
  // Predicated region
  $region22: #{double_conv.4} parent=0 // pred_check
    _
  $region23: #{double_conv.4} parent=0 // pred_check_branch
    %757 = sbr.rel (0) target = $region25
  $region24: #{double_conv.4} parent=0 // pred_region
    _
  $region25: #{double_conv.4} parent=0 // pred_fallthru
    _
  // Predicated region
  $region26: #{double_conv.4} parent=0 // pred_check
    _
  $region27: #{double_conv.4} parent=0 // pred_check_branch
    %759 = sbr.rel (0) target = $region29
  $region28: #{double_conv.4} parent=0 // pred_region
    _
  $region29: #{double_conv.4} parent=0 // pred_fallthru
    _
  // Predicated region
  $region30: #{double_conv.4} parent=0 // pred_check
    _
  $region31: #{double_conv.4} parent=0 // pred_check_branch
    %761 = sbr.rel (0) target = $region33
  $region32: #{double_conv.4} parent=0 // pred_region
    _
  $region33: #{double_conv.4} parent=0 // pred_fallthru
    _
  // Predicated region
  $region34: #{double_conv.4} parent=0 // pred_check
    _
  $region35: #{double_conv.4} parent=0 // pred_check_branch
    %763 = sbr.rel (0) target = $region37
  $region36: #{double_conv.4} parent=0 // pred_region
    _
  $region37: #{double_conv.4} parent=0 // pred_fallthru
    _
  // Predicated region
  $region38: #{double_conv.4} parent=0 // pred_check
    _
  $region39: #{double_conv.4} parent=0 // pred_check_branch
    %765 = sbr.rel (0) target = $region41
  $region40: #{double_conv.4} parent=0 // pred_region
    _
  $region41: #{double_conv.4} parent=0 // pred_fallthru
    _

</llo_original>
